<compile_context>
chip_gen: v7x
topology: tpu7x:2x2x1
jax: 0.10.0
libtpu: 0.0.40
codegen_flags: <defaults>
</compile_context>

<pallas_src>
import functools

import jax
import jax.numpy as jnp
import numpy as np
from jax.experimental import pallas as pl
from jax.experimental.pallas import tpu as pltpu

_BN_EPS = 1e-5  # PyTorch BatchNorm2d default
_TOP = 8        # first content row of the padded scratch (8-sublane aligned)


def _residual_block_kernel(x_ref, wb1_ref, wb2_ref, b1_ref, b2_ref, o_ref,
                           p1_ref, p2_ref, *, nb, h, s, m):
    # x_ref  : (nb, h, W*C) f32   row-flat NHWC input block (also the identity)
    # wb*_ref: (3, W*C, W*C) bf16 BN-scale-folded banded conv weights (per ky)
    # b*_ref : (1, W*C)      f32  folded BN shift, tiled over W (lane-dense)
    # o_ref  : (nb, h, W*C)  f32  row-flat output block
    # p*_ref : (_TOP + nb*s, W*C) f32 scratch; images stacked, zero gutters
    wc = x_ref.shape[-1]
    g = s - h  # gutter rows below each image (>= 2; chosen so s % 8 == 0)

    def zero_gutters(p_ref):
        # Top pad + the g-row gutter below every image.  All stores are
        # sublane-aligned and lane-dense, and are re-done every grid step so
        # correctness never depends on scratch persistence across steps/cores.
        p_ref[0:_TOP, :] = jnp.zeros((_TOP, wc), jnp.float32)
        for i in range(nb):
            lo = _TOP + i * s + h
            p_ref[lo:lo + g, :] = jnp.zeros((g, wc), jnp.float32)

    def conv3x3(p_ref, wb_ref, b_ref):
        # 3 banded matmuls over the whole image stack: (m, W*C) x (W*C, W*C),
        # bf16 operands, f32 accumulation; the BN shift rides on the first dot.
        lhs0 = p_ref[_TOP - 1:_TOP - 1 + m, :].astype(jnp.bfloat16)
        acc = jnp.dot(lhs0, wb_ref[0],
                      preferred_element_type=jnp.float32) + b_ref[...]
        lhs1 = p_ref[_TOP:_TOP + m, :].astype(jnp.bfloat16)
        acc = acc + jnp.dot(lhs1, wb_ref[1], preferred_element_type=jnp.float32)
        lhs2 = p_ref[_TOP + 1:_TOP + 1 + m, :].astype(jnp.bfloat16)
        acc = acc + jnp.dot(lhs2, wb_ref[2], preferred_element_type=jnp.float32)
        return acc  # (m, wc) f32

    # conv1 (BN1 scale folded into wb1) -> +shift -> ReLU
    zero_gutters(p1_ref)
    for i in range(nb):
        lo = _TOP + i * s
        p1_ref[lo:lo + h, :] = x_ref[i]
    y = jnp.maximum(conv3x3(p1_ref, wb1_ref, b1_ref), 0.0)

    # conv2 (BN2 scale folded into wb2) -> +shift -> +identity -> ReLU
    # One aligned slab store (image-seam rows carry garbage), then re-zero the
    # gutters before the second conv reads them.
    p2_ref[_TOP:_TOP + m, :] = y
    zero_gutters(p2_ref)
    acc2 = conv3x3(p2_ref, wb2_ref, b2_ref)
    for i in range(nb):
        z = acc2[i * s:i * s + h, :] + x_ref[i]        # identity stays f32
        o_ref[i] = jnp.maximum(z, 0.0).astype(o_ref.dtype)


def _fold_bn(bn):
    gamma, beta, mean, var = (jnp.asarray(p, jnp.float32) for p in bn)
    scale = gamma / jnp.sqrt(var + _BN_EPS)
    shift = beta - mean * scale
    return scale, shift


def _banded_weights(w_hwio, W):
    """(3, 3, Cin, Cout) -> (3, W*Cin, W*Cout) banded matmul weights.

    Wb[ky, wi*Cin + ci, wo*Cout + co] = w_hwio[ky, wi - wo + 1, ci, co] when
    0 <= wi - wo + 1 <= 2, else 0.  Taps that would read outside [0, W) are
    dropped, which realizes the left/right zero padding without padded lanes
    (contraction axis is exactly W*Cin).
    """
    _, _, Cin, Cout = w_hwio.shape
    band = np.zeros((3, W, W), np.float32)           # (kx, wi, wo)
    for kx in range(3):
        for wo in range(W):
            wi = wo + kx - 1
            if 0 <= wi < W:
                band[kx, wi, wo] = 1.0
    wb = jnp.einsum("xiw,yxco->yicwo", jnp.asarray(band), w_hwio)
    return wb.reshape(3, W * Cin, W * Cout)


def _pick_images_per_step(n):
    # Largest divisor of n that still leaves >= 2 grid steps (keeps both v7x
    # TensorCores busy), capped at 8 images per step.
    target = min(8, max(1, n // 2))
    for d in range(target, 0, -1):
        if n % d == 0:
            return d
    return 1


def residual_block_pallas(x_nchw, w1_oihw, w2_oihw, bn1, bn2):
    """Fused ResidualBlock forward (stride=1, downsample=None, eval-mode BN)."""
    N, Cin, H, W = x_nchw.shape
    Cout = w1_oihw.shape[0]
    assert Cin == Cout, "downsample=None branch requires in_channels == out_channels"
    C = Cout
    WC = W * C
    # Perf (not correctness) assumptions: lane-dense stores want WC % 128 == 0
    # and the 8-sublane alignment of the stacked layout wants H % 8 == 0.

    nb = _pick_images_per_step(N)
    g = 2 + ((-(H + 2)) % 8)      # >= 2 zero rows per seam, (H + g) % 8 == 0
    s = H + g                     # per-image row stride inside the scratch
    m = (nb - 1) * s + H          # matmul M: stacked rows incl. seam garbage
    rows = _TOP + nb * s          # scratch rows

    # NCHW -> NHWC -> row-flat (N, H, W*C).
    # TODO(synk): in a real model keep activations in this row-flat NHWC layout
    # end-to-end so these two transposes (a full HBM read+write each) vanish.
    x = jnp.transpose(x_nchw, (0, 2, 3, 1)).astype(jnp.float32).reshape(N, H, WC)

    s1, b1 = _fold_bn(bn1)
    s2, b2 = _fold_bn(bn2)

    # OIHW -> (ky, kx, ci, co); fold BN scales into the conv weights; bf16 MXU
    # operands (accumulation stays f32 in-kernel).
    w1_hwio = jnp.transpose(w1_oihw, (2, 3, 1, 0)).astype(jnp.float32) * s1
    w2_hwio = jnp.transpose(w2_oihw, (2, 3, 1, 0)).astype(jnp.float32) * s2
    wb1 = _banded_weights(w1_hwio, W).astype(jnp.bfloat16)   # (3, WC, WC)
    wb2 = _banded_weights(w2_hwio, W).astype(jnp.bfloat16)
    b1t = jnp.tile(b1, W).reshape(1, WC)                     # lane-dense shift
    b2t = jnp.tile(b2, W).reshape(1, WC)

    kernel = functools.partial(_residual_block_kernel, nb=nb, h=H, s=s, m=m)

    # TODO(synk): weights/biases are grid-invariant; single-buffer them
    # (pl.Buffered(1) / one-shot DMA) and move to a W/H-tiled grid with compact
    # per-ky weights before real ResNet stage sizes, so the (W*C)^2 banded
    # weight and activation blocks fit v7x's 64 MiB VMEM.
    out_flat = pl.pallas_call(
        kernel,
        out_shape=jax.ShapeDtypeStruct((N, H, WC), jnp.float32),
        grid_spec=pltpu.PrefetchScalarGridSpec(
            num_scalar_prefetch=0,
            grid=(N // nb,),
            in_specs=[
                pl.BlockSpec((nb, H, WC), lambda b: (b, 0, 0)),
                pl.BlockSpec((3, WC, WC), lambda b: (0, 0, 0)),
                pl.BlockSpec((3, WC, WC), lambda b: (0, 0, 0)),
                pl.BlockSpec((1, WC), lambda b: (0, 0)),
                pl.BlockSpec((1, WC), lambda b: (0, 0)),
            ],
            out_specs=pl.BlockSpec((nb, H, WC), lambda b: (b, 0, 0)),
            scratch_shapes=[
                pltpu.VMEM((rows, WC), jnp.float32),
                pltpu.VMEM((rows, WC), jnp.float32),
            ],
        ),
        compiler_params=pltpu.CompilerParams(dimension_semantics=("parallel",)),
    )(x, wb1, wb2, b1t, b2t)

    out = out_flat.reshape(N, H, W, C)
    return jnp.transpose(out, (0, 3, 1, 2))                  # back to NCHW


def residual_block_ref(x, w1, w2, bn1, bn2):
    """Pure-JAX reference (NCHW, matches PyTorch eval-mode semantics)."""
    def conv(a, w):
        return jax.lax.conv_general_dilated(
            a, w, window_strides=(1, 1), padding=((1, 1), (1, 1)),
            dimension_numbers=("NCHW", "OIHW", "NCHW"))

    def bn(a, params):
        g, b, m, v = (p.reshape(1, -1, 1, 1) for p in params)
        return (a - m) / jnp.sqrt(v + _BN_EPS) * g + b

    out = jax.nn.relu(bn(conv(x, w1), bn1))
    out = bn(conv(out, w2), bn2)
    return jax.nn.relu(out + x)


if __name__ == "__main__":
    key = jax.random.PRNGKey(0)
    N, C, H, W = 8, 8, 16, 16  # in_channels == out_channels, stride=1, no downsample

    ks = jax.random.split(key, 12)
    x = jax.random.normal(ks[0], (N, C, H, W), jnp.float32)

    # conv weights, PyTorch layout (out_channels, in_channels, 3, 3)
    w1 = jax.random.normal(ks[1], (C, C, 3, 3), jnp.float32) * 0.1
    w2 = jax.random.normal(ks[2], (C, C, 3, 3), jnp.float32) * 0.1

    # BatchNorm params (gamma, beta, running_mean, running_var)
    bn1 = (jax.random.uniform(ks[3], (C,), minval=0.5, maxval=1.5),
           jax.random.normal(ks[4], (C,)) * 0.1,
           jax.random.normal(ks[5], (C,)) * 0.1,
           jax.random.uniform(ks[6], (C,), minval=0.5, maxval=1.5))
    bn2 = (jax.random.uniform(ks[7], (C,), minval=0.5, maxval=1.5),
           jax.random.normal(ks[8], (C,)) * 0.1,
           jax.random.normal(ks[9], (C,)) * 0.1,
           jax.random.uniform(ks[10], (C,), minval=0.5, maxval=1.5))

    out = residual_block_pallas(x, w1, w2, bn1, bn2)
    out = jax.block_until_ready(out)

    ref = residual_block_ref(x, w1, w2, bn1, bn2)
    # bf16 MXU operands with f32 accumulation: tolerance is loosened vs. the
    # pure-f32 reference (typical |err| is O(1e-2) at these activation scales).
    np.testing.assert_allclose(np.asarray(out), np.asarray(ref),
                               rtol=5e-2, atol=1e-1)
    print("KERNEL_OK")
</pallas_src>

<mosaic_0001>
module attributes {stable_mosaic.version = 11 : i64} {
  func.func @_residual_block_kernel(%arg0: i32, %arg1: memref<4x16x128xf32, #tpu.memory_space<vmem>>, %arg2: memref<3x128x128xbf16, #tpu.memory_space<vmem>>, %arg3: memref<3x128x128xbf16, #tpu.memory_space<vmem>>, %arg4: memref<1x128xf32, #tpu.memory_space<vmem>>, %arg5: memref<1x128xf32, #tpu.memory_space<vmem>>, %arg6: memref<4x16x128xf32, #tpu.memory_space<vmem>>, %arg7: memref<104x128xf32, #tpu.memory_space<vmem>>, %arg8: memref<104x128xf32, #tpu.memory_space<vmem>>) attributes {dimension_semantics = [#tpu.dimension_semantics<parallel>], iteration_bounds = array<i64: 2>, scalar_prefetch = 0 : i64, scratch_operands = 2 : i64, tpu.core_type = #tpu.core_type<tc>, window_params = [{transform_indices = @transform_0, window_bounds = array<i64: 4, 16, 128>}, {pipeline_mode = #tpu.pipeline_mode<synchronous>, transform_indices = @transform_1, window_bounds = array<i64: 3, 128, 128>}, {pipeline_mode = #tpu.pipeline_mode<synchronous>, transform_indices = @transform_2, window_bounds = array<i64: 3, 128, 128>}, {pipeline_mode = #tpu.pipeline_mode<synchronous>, transform_indices = @transform_3, window_bounds = array<i64: 1, 128>}, {pipeline_mode = #tpu.pipeline_mode<synchronous>, transform_indices = @transform_4, window_bounds = array<i64: 1, 128>}, {transform_indices = @transform_5, window_bounds = array<i64: 4, 16, 128>}]} {
    %cst = arith.constant 0.000000e+00 : f32
    %0 = vector.broadcast %cst : f32 to vector<8x128xf32>
    %c0 = arith.constant 0 : index
    %c0_0 = arith.constant 0 : index
    %1 = vector.load %arg7[%c0, %c0_0] : memref<104x128xf32, #tpu.memory_space<vmem>>, vector<8x128xf32>
    tpu.vector_store %arg7[%c0, %c0_0], %0 {strides = array<i32>} : memref<104x128xf32, #tpu.memory_space<vmem>>, vector<8x128xf32>,
    %cst_1 = arith.constant 0.000000e+00 : f32
    %2 = vector.broadcast %cst_1 : f32 to vector<8x128xf32>
    %c24 = arith.constant 24 : index
    %c0_2 = arith.constant 0 : index
    %3 = vector.load %arg7[%c24, %c0_2] : memref<104x128xf32, #tpu.memory_space<vmem>>, vector<8x128xf32>
    tpu.vector_store %arg7[%c24, %c0_2], %2 {strides = array<i32>} : memref<104x128xf32, #tpu.memory_space<vmem>>, vector<8x128xf32>,
    %cst_3 = arith.constant 0.000000e+00 : f32
    %4 = vector.broadcast %cst_3 : f32 to vector<8x128xf32>
    %c48 = arith.constant 48 : index
    %c0_4 = arith.constant 0 : index
    %5 = vector.load %arg7[%c48, %c0_4] : memref<104x128xf32, #tpu.memory_space<vmem>>, vector<8x128xf32>
    tpu.vector_store %arg7[%c48, %c0_4], %4 {strides = array<i32>} : memref<104x128xf32, #tpu.memory_space<vmem>>, vector<8x128xf32>,
    %cst_5 = arith.constant 0.000000e+00 : f32
    %6 = vector.broadcast %cst_5 : f32 to vector<8x128xf32>
    %c72 = arith.constant 72 : index
    %c0_6 = arith.constant 0 : index
    %7 = vector.load %arg7[%c72, %c0_6] : memref<104x128xf32, #tpu.memory_space<vmem>>, vector<8x128xf32>
    tpu.vector_store %arg7[%c72, %c0_6], %6 {strides = array<i32>} : memref<104x128xf32, #tpu.memory_space<vmem>>, vector<8x128xf32>,
    %cst_7 = arith.constant 0.000000e+00 : f32
    %8 = vector.broadcast %cst_7 : f32 to vector<8x128xf32>
    %c96 = arith.constant 96 : index
    %c0_8 = arith.constant 0 : index
    %9 = vector.load %arg7[%c96, %c0_8] : memref<104x128xf32, #tpu.memory_space<vmem>>, vector<8x128xf32>
    tpu.vector_store %arg7[%c96, %c0_8], %8 {strides = array<i32>} : memref<104x128xf32, #tpu.memory_space<vmem>>, vector<8x128xf32>,
    %c0_9 = arith.constant 0 : index
    %c0_10 = arith.constant 0 : index
    %c0_11 = arith.constant 0 : index
    %10 = vector.load %arg1[%c0_9, %c0_10, %c0_11] : memref<4x16x128xf32, #tpu.memory_space<vmem>>, vector<1x16x128xf32>
    %11 = vector.shape_cast %10 : vector<1x16x128xf32> to vector<16x128xf32>
    %c8 = arith.constant 8 : index
    %c0_12 = arith.constant 0 : index
    %12 = vector.load %arg7[%c8, %c0_12] : memref<104x128xf32, #tpu.memory_space<vmem>>, vector<16x128xf32>
    tpu.vector_store %arg7[%c8, %c0_12], %11 {strides = array<i32>} : memref<104x128xf32, #tpu.memory_space<vmem>>, vector<16x128xf32>,
    %c1 = arith.constant 1 : index
    %c0_13 = arith.constant 0 : index
    %c0_14 = arith.constant 0 : index
    %13 = vector.load %arg1[%c1, %c0_13, %c0_14] : memref<4x16x128xf32, #tpu.memory_space<vmem>>, vector<1x16x128xf32>
    %14 = vector.shape_cast %13 : vector<1x16x128xf32> to vector<16x128xf32>
    %c32 = arith.constant 32 : index
    %c0_15 = arith.constant 0 : index
    %15 = vector.load %arg7[%c32, %c0_15] : memref<104x128xf32, #tpu.memory_space<vmem>>, vector<16x128xf32>
    tpu.vector_store %arg7[%c32, %c0_15], %14 {strides = array<i32>} : memref<104x128xf32, #tpu.memory_space<vmem>>, vector<16x128xf32>,
    %c2 = arith.constant 2 : index
    %c0_16 = arith.constant 0 : index
    %c0_17 = arith.constant 0 : index
    %16 = vector.load %arg1[%c2, %c0_16, %c0_17] : memref<4x16x128xf32, #tpu.memory_space<vmem>>, vector<1x16x128xf32>
    %17 = vector.shape_cast %16 : vector<1x16x128xf32> to vector<16x128xf32>
    %c56 = arith.constant 56 : index
    %c0_18 = arith.constant 0 : index
    %18 = vector.load %arg7[%c56, %c0_18] : memref<104x128xf32, #tpu.memory_space<vmem>>, vector<16x128xf32>
    tpu.vector_store %arg7[%c56, %c0_18], %17 {strides = array<i32>} : memref<104x128xf32, #tpu.memory_space<vmem>>, vector<16x128xf32>,
    %c3 = arith.constant 3 : index
    %c0_19 = arith.constant 0 : index
    %c0_20 = arith.constant 0 : index
    %19 = vector.load %arg1[%c3, %c0_19, %c0_20] : memref<4x16x128xf32, #tpu.memory_space<vmem>>, vector<1x16x128xf32>
    %20 = vector.shape_cast %19 : vector<1x16x128xf32> to vector<16x128xf32>
    %c80 = arith.constant 80 : index
    %c0_21 = arith.constant 0 : index
    %21 = vector.load %arg7[%c80, %c0_21] : memref<104x128xf32, #tpu.memory_space<vmem>>, vector<16x128xf32>
    tpu.vector_store %arg7[%c80, %c0_21], %20 {strides = array<i32>} : memref<104x128xf32, #tpu.memory_space<vmem>>, vector<16x128xf32>,
    %c7 = arith.constant 7 : index
    %c0_22 = arith.constant 0 : index
    %22 = vector.load %arg7[%c7, %c0_22] : memref<104x128xf32, #tpu.memory_space<vmem>>, vector<88x128xf32>
    %23 = arith.truncf %22 : vector<88x128xf32> to vector<88x128xbf16>
    %c0_23 = arith.constant 0 : index
    %c0_24 = arith.constant 0 : index
    %c0_25 = arith.constant 0 : index
    %24 = vector.load %arg2[%c0_23, %c0_24, %c0_25] : memref<3x128x128xbf16, #tpu.memory_space<vmem>>, vector<1x128x128xbf16>
    %25 = vector.shape_cast %24 : vector<1x128x128xbf16> to vector<128x128xbf16>
    %cst_26 = arith.constant dense<0.000000e+00> : vector<88x128xf32>
    %26 = tpu.matmul %23, %25, %cst_26 {dimension_numbers = #tpu.dot_dimension_numbers<[1], [0], [0], [1], [0, 0, 1, 1], [], []>} : vector<88x128xbf16>, vector<128x128xbf16>, vector<88x128xf32> -> vector<88x128xf32>
    %c0_27 = arith.constant 0 : index
    %c0_28 = arith.constant 0 : index
    %27 = vector.load %arg4[%c0_27, %c0_28] : memref<1x128xf32, #tpu.memory_space<vmem>>, vector<1x128xf32>
    %28 = vector.broadcast %27 : vector<1x128xf32> to vector<88x128xf32>
    %29 = arith.addf %26, %28 : vector<88x128xf32>
    %c8_29 = arith.constant 8 : index
    %c0_30 = arith.constant 0 : index
    %30 = vector.load %arg7[%c8_29, %c0_30] : memref<104x128xf32, #tpu.memory_space<vmem>>, vector<88x128xf32>
    %31 = arith.truncf %30 : vector<88x128xf32> to vector<88x128xbf16>
    %c1_31 = arith.constant 1 : index
    %c0_32 = arith.constant 0 : index
    %c0_33 = arith.constant 0 : index
    %32 = vector.load %arg2[%c1_31, %c0_32, %c0_33] : memref<3x128x128xbf16, #tpu.memory_space<vmem>>, vector<1x128x128xbf16>
    %33 = vector.shape_cast %32 : vector<1x128x128xbf16> to vector<128x128xbf16>
    %cst_34 = arith.constant dense<0.000000e+00> : vector<88x128xf32>
    %34 = tpu.matmul %31, %33, %cst_34 {dimension_numbers = #tpu.dot_dimension_numbers<[1], [0], [0], [1], [0, 0, 1, 1], [], []>} : vector<88x128xbf16>, vector<128x128xbf16>, vector<88x128xf32> -> vector<88x128xf32>
    %35 = arith.addf %29, %34 : vector<88x128xf32>
    %c9 = arith.constant 9 : index
    %c0_35 = arith.constant 0 : index
    %36 = vector.load %arg7[%c9, %c0_35] : memref<104x128xf32, #tpu.memory_space<vmem>>, vector<88x128xf32>
    %37 = arith.truncf %36 : vector<88x128xf32> to vector<88x128xbf16>
    %c2_36 = arith.constant 2 : index
    %c0_37 = arith.constant 0 : index
    %c0_38 = arith.constant 0 : index
    %38 = vector.load %arg2[%c2_36, %c0_37, %c0_38] : memref<3x128x128xbf16, #tpu.memory_space<vmem>>, vector<1x128x128xbf16>
    %39 = vector.shape_cast %38 : vector<1x128x128xbf16> to vector<128x128xbf16>
    %cst_39 = arith.constant dense<0.000000e+00> : vector<88x128xf32>
    %40 = tpu.matmul %37, %39, %cst_39 {dimension_numbers = #tpu.dot_dimension_numbers<[1], [0], [0], [1], [0, 0, 1, 1], [], []>} : vector<88x128xbf16>, vector<128x128xbf16>, vector<88x128xf32> -> vector<88x128xf32>
    %41 = arith.addf %35, %40 : vector<88x128xf32>
    %cst_40 = arith.constant 0.000000e+00 : f32
    %42 = vector.broadcast %cst_40 : f32 to vector<88x128xf32>
    %43 = arith.maximumf %41, %42 : vector<88x128xf32>
    %c8_41 = arith.constant 8 : index
    %c0_42 = arith.constant 0 : index
    %44 = vector.load %arg8[%c8_41, %c0_42] : memref<104x128xf32, #tpu.memory_space<vmem>>, vector<88x128xf32>
    tpu.vector_store %arg8[%c8_41, %c0_42], %43 {strides = array<i32>} : memref<104x128xf32, #tpu.memory_space<vmem>>, vector<88x128xf32>,
    %cst_43 = arith.constant 0.000000e+00 : f32
    %45 = vector.broadcast %cst_43 : f32 to vector<8x128xf32>
    %c0_44 = arith.constant 0 : index
    %c0_45 = arith.constant 0 : index
    %46 = vector.load %arg8[%c0_44, %c0_45] : memref<104x128xf32, #tpu.memory_space<vmem>>, vector<8x128xf32>
    tpu.vector_store %arg8[%c0_44, %c0_45], %45 {strides = array<i32>} : memref<104x128xf32, #tpu.memory_space<vmem>>, vector<8x128xf32>,
    %cst_46 = arith.constant 0.000000e+00 : f32
    %47 = vector.broadcast %cst_46 : f32 to vector<8x128xf32>
    %c24_47 = arith.constant 24 : index
    %c0_48 = arith.constant 0 : index
    %48 = vector.load %arg8[%c24_47, %c0_48] : memref<104x128xf32, #tpu.memory_space<vmem>>, vector<8x128xf32>
    tpu.vector_store %arg8[%c24_47, %c0_48], %47 {strides = array<i32>} : memref<104x128xf32, #tpu.memory_space<vmem>>, vector<8x128xf32>,
    %cst_49 = arith.constant 0.000000e+00 : f32
    %49 = vector.broadcast %cst_49 : f32 to vector<8x128xf32>
    %c48_50 = arith.constant 48 : index
    %c0_51 = arith.constant 0 : index
    %50 = vector.load %arg8[%c48_50, %c0_51] : memref<104x128xf32, #tpu.memory_space<vmem>>, vector<8x128xf32>
    tpu.vector_store %arg8[%c48_50, %c0_51], %49 {strides = array<i32>} : memref<104x128xf32, #tpu.memory_space<vmem>>, vector<8x128xf32>,
    %cst_52 = arith.constant 0.000000e+00 : f32
    %51 = vector.broadcast %cst_52 : f32 to vector<8x128xf32>
    %c72_53 = arith.constant 72 : index
    %c0_54 = arith.constant 0 : index
    %52 = vector.load %arg8[%c72_53, %c0_54] : memref<104x128xf32, #tpu.memory_space<vmem>>, vector<8x128xf32>
    tpu.vector_store %arg8[%c72_53, %c0_54], %51 {strides = array<i32>} : memref<104x128xf32, #tpu.memory_space<vmem>>, vector<8x128xf32>,
    %cst_55 = arith.constant 0.000000e+00 : f32
    %53 = vector.broadcast %cst_55 : f32 to vector<8x128xf32>
    %c96_56 = arith.constant 96 : index
    %c0_57 = arith.constant 0 : index
    %54 = vector.load %arg8[%c96_56, %c0_57] : memref<104x128xf32, #tpu.memory_space<vmem>>, vector<8x128xf32>
    tpu.vector_store %arg8[%c96_56, %c0_57], %53 {strides = array<i32>} : memref<104x128xf32, #tpu.memory_space<vmem>>, vector<8x128xf32>,
    %c7_58 = arith.constant 7 : index
    %c0_59 = arith.constant 0 : index
    %55 = vector.load %arg8[%c7_58, %c0_59] : memref<104x128xf32, #tpu.memory_space<vmem>>, vector<88x128xf32>
    %56 = arith.truncf %55 : vector<88x128xf32> to vector<88x128xbf16>
    %c0_60 = arith.constant 0 : index
    %c0_61 = arith.constant 0 : index
    %c0_62 = arith.constant 0 : index
    %57 = vector.load %arg3[%c0_60, %c0_61, %c0_62] : memref<3x128x128xbf16, #tpu.memory_space<vmem>>, vector<1x128x128xbf16>
    %58 = vector.shape_cast %57 : vector<1x128x128xbf16> to vector<128x128xbf16>
    %cst_63 = arith.constant dense<0.000000e+00> : vector<88x128xf32>
    %59 = tpu.matmul %56, %58, %cst_63 {dimension_numbers = #tpu.dot_dimension_numbers<[1], [0], [0], [1], [0, 0, 1, 1], [], []>} : vector<88x128xbf16>, vector<128x128xbf16>, vector<88x128xf32> -> vector<88x128xf32>
    %c0_64 = arith.constant 0 : index
    %c0_65 = arith.constant 0 : index
    %60 = vector.load %arg5[%c0_64, %c0_65] : memref<1x128xf32, #tpu.memory_space<vmem>>, vector<1x128xf32>
    %61 = vector.broadcast %60 : vector<1x128xf32> to vector<88x128xf32>
    %62 = arith.addf %59, %61 : vector<88x128xf32>
    %c8_66 = arith.constant 8 : index
    %c0_67 = arith.constant 0 : index
    %63 = vector.load %arg8[%c8_66, %c0_67] : memref<104x128xf32, #tpu.memory_space<vmem>>, vector<88x128xf32>
    %64 = arith.truncf %63 : vector<88x128xf32> to vector<88x128xbf16>
    %c1_68 = arith.constant 1 : index
    %c0_69 = arith.constant 0 : index
    %c0_70 = arith.constant 0 : index
    %65 = vector.load %arg3[%c1_68, %c0_69, %c0_70] : memref<3x128x128xbf16, #tpu.memory_space<vmem>>, vector<1x128x128xbf16>
    %66 = vector.shape_cast %65 : vector<1x128x128xbf16> to vector<128x128xbf16>
    %cst_71 = arith.constant dense<0.000000e+00> : vector<88x128xf32>
    %67 = tpu.matmul %64, %66, %cst_71 {dimension_numbers = #tpu.dot_dimension_numbers<[1], [0], [0], [1], [0, 0, 1, 1], [], []>} : vector<88x128xbf16>, vector<128x128xbf16>, vector<88x128xf32> -> vector<88x128xf32>
    %68 = arith.addf %62, %67 : vector<88x128xf32>
    %c9_72 = arith.constant 9 : index
    %c0_73 = arith.constant 0 : index
    %69 = vector.load %arg8[%c9_72, %c0_73] : memref<104x128xf32, #tpu.memory_space<vmem>>, vector<88x128xf32>
    %70 = arith.truncf %69 : vector<88x128xf32> to vector<88x128xbf16>
    %c2_74 = arith.constant 2 : index
    %c0_75 = arith.constant 0 : index
    %c0_76 = arith.constant 0 : index
    %71 = vector.load %arg3[%c2_74, %c0_75, %c0_76] : memref<3x128x128xbf16, #tpu.memory_space<vmem>>, vector<1x128x128xbf16>
    %72 = vector.shape_cast %71 : vector<1x128x128xbf16> to vector<128x128xbf16>
    %cst_77 = arith.constant dense<0.000000e+00> : vector<88x128xf32>
    %73 = tpu.matmul %70, %72, %cst_77 {dimension_numbers = #tpu.dot_dimension_numbers<[1], [0], [0], [1], [0, 0, 1, 1], [], []>} : vector<88x128xbf16>, vector<128x128xbf16>, vector<88x128xf32> -> vector<88x128xf32>
    %74 = arith.addf %68, %73 : vector<88x128xf32>
    %75 = vector.extract_strided_slice %74 {offsets = [0, 0], sizes = [16, 128], strides = [1, 1]} : vector<88x128xf32> to vector<16x128xf32>
    %c0_78 = arith.constant 0 : index
    %c0_79 = arith.constant 0 : index
    %c0_80 = arith.constant 0 : index
    %76 = vector.load %arg1[%c0_78, %c0_79, %c0_80] : memref<4x16x128xf32, #tpu.memory_space<vmem>>, vector<1x16x128xf32>
    %77 = vector.shape_cast %76 : vector<1x16x128xf32> to vector<16x128xf32>
    %78 = arith.addf %75, %77 : vector<16x128xf32>
    %cst_81 = arith.constant 0.000000e+00 : f32
    %79 = vector.broadcast %cst_81 : f32 to vector<16x128xf32>
    %80 = arith.maximumf %78, %79 : vector<16x128xf32>
    %c0_82 = arith.constant 0 : index
    %c0_83 = arith.constant 0 : index
    %c0_84 = arith.constant 0 : index
    %81 = vector.load %arg6[%c0_82, %c0_83, %c0_84] : memref<4x16x128xf32, #tpu.memory_space<vmem>>, vector<1x16x128xf32>
    %82 = vector.shape_cast %81 : vector<1x16x128xf32> to vector<16x128xf32>
    %83 = vector.shape_cast %80 : vector<16x128xf32> to vector<1x16x128xf32>
    tpu.vector_store %arg6[%c0_82, %c0_83, %c0_84], %83 {strides = array<i32>} : memref<4x16x128xf32, #tpu.memory_space<vmem>>, vector<1x16x128xf32>,
    %84 = vector.extract_strided_slice %74 {offsets = [24, 0], sizes = [16, 128], strides = [1, 1]} : vector<88x128xf32> to vector<16x128xf32>
    %c1_85 = arith.constant 1 : index
    %c0_86 = arith.constant 0 : index
    %c0_87 = arith.constant 0 : index
    %85 = vector.load %arg1[%c1_85, %c0_86, %c0_87] : memref<4x16x128xf32, #tpu.memory_space<vmem>>, vector<1x16x128xf32>
    %86 = vector.shape_cast %85 : vector<1x16x128xf32> to vector<16x128xf32>
    %87 = arith.addf %84, %86 : vector<16x128xf32>
    %cst_88 = arith.constant 0.000000e+00 : f32
    %88 = vector.broadcast %cst_88 : f32 to vector<16x128xf32>
    %89 = arith.maximumf %87, %88 : vector<16x128xf32>
    %c1_89 = arith.constant 1 : index
    %c0_90 = arith.constant 0 : index
    %c0_91 = arith.constant 0 : index
    %90 = vector.load %arg6[%c1_89, %c0_90, %c0_91] : memref<4x16x128xf32, #tpu.memory_space<vmem>>, vector<1x16x128xf32>
    %91 = vector.shape_cast %90 : vector<1x16x128xf32> to vector<16x128xf32>
    %92 = vector.shape_cast %89 : vector<16x128xf32> to vector<1x16x128xf32>
    tpu.vector_store %arg6[%c1_89, %c0_90, %c0_91], %92 {strides = array<i32>} : memref<4x16x128xf32, #tpu.memory_space<vmem>>, vector<1x16x128xf32>,
    %93 = vector.extract_strided_slice %74 {offsets = [48, 0], sizes = [16, 128], strides = [1, 1]} : vector<88x128xf32> to vector<16x128xf32>
    %c2_92 = arith.constant 2 : index
    %c0_93 = arith.constant 0 : index
    %c0_94 = arith.constant 0 : index
    %94 = vector.load %arg1[%c2_92, %c0_93, %c0_94] : memref<4x16x128xf32, #tpu.memory_space<vmem>>, vector<1x16x128xf32>
    %95 = vector.shape_cast %94 : vector<1x16x128xf32> to vector<16x128xf32>
    %96 = arith.addf %93, %95 : vector<16x128xf32>
    %cst_95 = arith.constant 0.000000e+00 : f32
    %97 = vector.broadcast %cst_95 : f32 to vector<16x128xf32>
    %98 = arith.maximumf %96, %97 : vector<16x128xf32>
    %c2_96 = arith.constant 2 : index
    %c0_97 = arith.constant 0 : index
    %c0_98 = arith.constant 0 : index
    %99 = vector.load %arg6[%c2_96, %c0_97, %c0_98] : memref<4x16x128xf32, #tpu.memory_space<vmem>>, vector<1x16x128xf32>
    %100 = vector.shape_cast %99 : vector<1x16x128xf32> to vector<16x128xf32>
    %101 = vector.shape_cast %98 : vector<16x128xf32> to vector<1x16x128xf32>
    tpu.vector_store %arg6[%c2_96, %c0_97, %c0_98], %101 {strides = array<i32>} : memref<4x16x128xf32, #tpu.memory_space<vmem>>, vector<1x16x128xf32>,
    %102 = vector.extract_strided_slice %74 {offsets = [72, 0], sizes = [16, 128], strides = [1, 1]} : vector<88x128xf32> to vector<16x128xf32>
    %c3_99 = arith.constant 3 : index
    %c0_100 = arith.constant 0 : index
    %c0_101 = arith.constant 0 : index
    %103 = vector.load %arg1[%c3_99, %c0_100, %c0_101] : memref<4x16x128xf32, #tpu.memory_space<vmem>>, vector<1x16x128xf32>
    %104 = vector.shape_cast %103 : vector<1x16x128xf32> to vector<16x128xf32>
    %105 = arith.addf %102, %104 : vector<16x128xf32>
    %cst_102 = arith.constant 0.000000e+00 : f32
    %106 = vector.broadcast %cst_102 : f32 to vector<16x128xf32>
    %107 = arith.maximumf %105, %106 : vector<16x128xf32>
    %c3_103 = arith.constant 3 : index
    %c0_104 = arith.constant 0 : index
    %c0_105 = arith.constant 0 : index
    %108 = vector.load %arg6[%c3_103, %c0_104, %c0_105] : memref<4x16x128xf32, #tpu.memory_space<vmem>>, vector<1x16x128xf32>
    %109 = vector.shape_cast %108 : vector<1x16x128xf32> to vector<16x128xf32>
    %110 = vector.shape_cast %107 : vector<16x128xf32> to vector<1x16x128xf32>
    tpu.vector_store %arg6[%c3_103, %c0_104, %c0_105], %110 {strides = array<i32>} : memref<4x16x128xf32, #tpu.memory_space<vmem>>, vector<1x16x128xf32>,
    return
  }
  func.func @transform_0(%arg0: i32) -> (i32, i32, i32) {
    %c0_i32 = arith.constant 0 : i32
    %c0_i32_0 = arith.constant 0 : i32
    %c0_i32_1 = arith.constant 0 : i32
    return %arg0, %c0_i32, %c0_i32_0 : i32, i32, i32
  }
  func.func @transform_1(%arg0: i32) -> (i32, i32, i32) {
    %c0_i32 = arith.constant 0 : i32
    %c0_i32_0 = arith.constant 0 : i32
    %c0_i32_1 = arith.constant 0 : i32
    %c0_i32_2 = arith.constant 0 : i32
    return %c0_i32, %c0_i32_0, %c0_i32_1 : i32, i32, i32
  }
  func.func @transform_2(%arg0: i32) -> (i32, i32, i32) {
    %c0_i32 = arith.constant 0 : i32
    %c0_i32_0 = arith.constant 0 : i32
    %c0_i32_1 = arith.constant 0 : i32
    %c0_i32_2 = arith.constant 0 : i32
    return %c0_i32, %c0_i32_0, %c0_i32_1 : i32, i32, i32
  }
  func.func @transform_3(%arg0: i32) -> (i32, i32) {
    %c0_i32 = arith.constant 0 : i32
    %c0_i32_0 = arith.constant 0 : i32
    %c0_i32_1 = arith.constant 0 : i32
    return %c0_i32, %c0_i32_0 : i32, i32
  }
  func.func @transform_4(%arg0: i32) -> (i32, i32) {
    %c0_i32 = arith.constant 0 : i32
    %c0_i32_0 = arith.constant 0 : i32
    %c0_i32_1 = arith.constant 0 : i32
    return %c0_i32, %c0_i32_0 : i32, i32
  }
  func.func @transform_5(%arg0: i32) -> (i32, i32, i32) {
    %c0_i32 = arith.constant 0 : i32
    %c0_i32_0 = arith.constant 0 : i32
    %c0_i32_1 = arith.constant 0 : i32
    return %arg0, %c0_i32, %c0_i32_0 : i32, i32, i32
  }
}

</mosaic_0001>

<llo_original>
// kernel: tpu_custom_call.1
$region0: #{tpu_custom_call.1}
  #allocation0 [shape = 'u32[]', space=smem, size = 0x4, offset = 0x4, fixed_abs, tag = 'smem constant byte address 0x4 - core index']
  #allocation1 [shape = 'u32[144,128]{1,0:T(1,128)}', space=vmem, size = 0x12000, scoped, tag = 'internal scratch']
  #allocation2 [shape = 'f32[104,128]{1,0:T(8,128)}', space=vmem, size = 0xd000, scoped, tag = 'scratch operand']
  #allocation3 [shape = 'f32[104,128]{1,0:T(8,128)}', space=vmem, size = 0xd000, scoped, tag = 'scratch operand']
  %s0 = inlined_call_operand.hbm [shape: f32[8,16,128], index: 0, kind: input, shape index: {}]
  %s1 = inlined_call_operand.hbm [shape: bf16[3,128,128], index: 1, kind: input, shape index: {}]
  %s2 = inlined_call_operand.hbm [shape: bf16[3,128,128], index: 2, kind: input, shape index: {}]
  %s3 = inlined_call_operand.vmem [shape: f32[1,128], index: 3, kind: input, shape index: {}]
  %s4 = inlined_call_operand.vmem [shape: f32[1,128], index: 4, kind: input, shape index: {}]
  %s5 = inlined_call_operand.hbm [shape: f32[8,16,128], index: 5, kind: output, shape index: {}]
  %s6 = sld [smem:[#allocation0]]
  $region65: #{tpu_custom_call.1} parent=0
    _
  %s8 = ssub.s32 1, %s6
  %s9 = scalar_select 0, %s8, %s6
  $region1: #{tpu_custom_call.1} parent=0
    #allocation4 [shape = 'u8[65536]{0}', space=vmem, size = 0x10000, scoped, tag = 'input window, operand 0']
    #allocation5 [shape = 's32[2]{0}', space=sflag, size = 0x8, scoped, tag = 'scoped memory for tpu_custom_call.1']
    #allocation6 [shape = 's32[2]{0}', space=sflag, size = 0x8, scoped, tag = 'scoped memory for tpu_custom_call.1']
    #allocation7 [shape = 'u8[98304]{0}', space=vmem, size = 0x18000, scoped, tag = 'input window, operand 1, single buffered']
    #allocation8 [shape = 's32[1]{0}', space=sflag, size = 0x4, scoped, tag = 'scoped memory for tpu_custom_call.1']
    #allocation9 [shape = 'u8[98304]{0}', space=vmem, size = 0x18000, scoped, tag = 'input window, operand 2, single buffered']
    #allocation10 [shape = 'u8[65536]{0}', space=vmem, size = 0x10000, scoped, tag = 'output window, operand 0']
    %10 = vsyncpa [#allocation5], 0
    %s11 = scalar_lea.sflag [#allocation5], 1
    %12 = vsyncpa %s11, 0
    %13 = vsyncpa [#allocation8], 0
    %14 = vsyncpa [#allocation6], 0
    %s15 = scalar_lea.sflag [#allocation6], 1
    %16 = vsyncpa %s15, 0
    loop: start=0, step=1, limit=4
    $region2: #{tpu_custom_call.1} parent=1 // loop_pre_header
      _
    $region3: #{tpu_custom_call.1} parent=1 // loop_header
      %s18 = sphi 0, %s22
      %p19 = scmp.ge.s32.totalorder %s18, 4
      %s28 = sphi 0, %s30
      %s31 = sphi 0, %s28
      %s32 = sphi 0, %s31
      %s48 = sphi 0, %s32
      %s52 = sphi 0, %s52
      %s54 = sphi 0, %s52
      %s55 = sphi 0, %s54
      %s69 = sphi 0, %s55
      %s73 = sphi 0, %s73
      %s75 = sphi 0, %s73
      %s76 = sphi 0, %s75
      %s90 = sphi 0, %s76
      %s94 = sphi 0, %s94
      %s96 = sphi 0, %s94
      %s97 = sphi 0, %s96
      %s111 = sphi 0, %s97
      %s115 = sphi 0, %s115
      %s117 = sphi 0, %s115
      %s118 = sphi 0, %s117
      %s132 = sphi 0, %s118
      %s138 = sphi 0, %s140
      %s141 = sphi 0, %s138
      %s142 = sphi 0, %s141
      %s158 = sphi 0, %s142
    $region4: #{tpu_custom_call.1} parent=1 // loop_header_branch
      %21 = sbr.rel (%p19) target = $region8
    $region5: #{tpu_custom_call.1} parent=1 // loop_body
      %s23 = ssub.s32 %s18, 1
      %s24 = ssub.s32 %s18, 2
      %s25 = sadd.s32 %s18, 1
      %s26 = ssub.s32 %s18, %s25
      %p27 = scmp.eq.s32.totalorder %s26, 0
      %s29 = sadd.s32 %s28, 1
      %s30 = scalar_select %p27, %s28, %s29
      %p33 = pneg %p27
      %p34 = scmp.eq.s32.totalorder %s18, 1
      %p35 = por %p33, %p34
      %p36 = scmp.ne.s32.totalorder %s28, %s31
      %p37 = scmp.eq.s32.totalorder %s18, 0
      %p38 = por %p36, %p37
      %p39 = scmp.ne.s32.totalorder %s28, %s31
      %p40 = scmp.eq.s32.totalorder %s23, 1
      %p41 = por %p39, %p40
      %p42 = scmp.ne.s32.totalorder %s31, %s32
      %p43 = scmp.eq.s32.totalorder %s23, 0
      %p44 = por %p42, %p43
      %p45 = scmp.ne.s32.totalorder %s31, %s32
      %p46 = scmp.eq.s32.totalorder %s24, 1
      %p47 = por %p45, %p46
      %p49 = scmp.ne.s32.totalorder %s32, %s48
      %p50 = scmp.eq.s32.totalorder %s24, 0
      %p51 = por %p49, %p50
      %s53 = sadd.s32 %s52, 1
      %p56 = scmp.eq.s32.totalorder %s18, 1
      %p57 = scmp.ne.s32.totalorder %s52, %s54
      %p58 = scmp.eq.s32.totalorder %s18, 0
      %p59 = por %p57, %p58
      %p60 = scmp.ne.s32.totalorder %s52, %s54
      %p61 = scmp.eq.s32.totalorder %s23, 1
      %p62 = por %p60, %p61
      %p63 = scmp.ne.s32.totalorder %s54, %s55
      %p64 = scmp.eq.s32.totalorder %s23, 0
      %p65 = por %p63, %p64
      %p66 = scmp.ne.s32.totalorder %s54, %s55
      %p67 = scmp.eq.s32.totalorder %s24, 1
      %p68 = por %p66, %p67
      %p70 = scmp.ne.s32.totalorder %s55, %s69
      %p71 = scmp.eq.s32.totalorder %s24, 0
      %p72 = por %p70, %p71
      %s74 = sadd.s32 %s73, 1
      %p77 = scmp.eq.s32.totalorder %s18, 1
      %p78 = scmp.ne.s32.totalorder %s73, %s75
      %p79 = scmp.eq.s32.totalorder %s18, 0
      %p80 = por %p78, %p79
      %p81 = scmp.ne.s32.totalorder %s73, %s75
      %p82 = scmp.eq.s32.totalorder %s23, 1
      %p83 = por %p81, %p82
      %p84 = scmp.ne.s32.totalorder %s75, %s76
      %p85 = scmp.eq.s32.totalorder %s23, 0
      %p86 = por %p84, %p85
      %p87 = scmp.ne.s32.totalorder %s75, %s76
      %p88 = scmp.eq.s32.totalorder %s24, 1
      %p89 = por %p87, %p88
      %p91 = scmp.ne.s32.totalorder %s76, %s90
      %p92 = scmp.eq.s32.totalorder %s24, 0
      %p93 = por %p91, %p92
      %s95 = sadd.s32 %s94, 1
      %p98 = scmp.eq.s32.totalorder %s18, 1
      %p99 = scmp.ne.s32.totalorder %s94, %s96
      %p100 = scmp.eq.s32.totalorder %s18, 0
      %p101 = por %p99, %p100
      %p102 = scmp.ne.s32.totalorder %s94, %s96
      %p103 = scmp.eq.s32.totalorder %s23, 1
      %p104 = por %p102, %p103
      %p105 = scmp.ne.s32.totalorder %s96, %s97
      %p106 = scmp.eq.s32.totalorder %s23, 0
      %p107 = por %p105, %p106
      %p108 = scmp.ne.s32.totalorder %s96, %s97
      %p109 = scmp.eq.s32.totalorder %s24, 1
      %p110 = por %p108, %p109
      %p112 = scmp.ne.s32.totalorder %s97, %s111
      %p113 = scmp.eq.s32.totalorder %s24, 0
      %p114 = por %p112, %p113
      %s116 = sadd.s32 %s115, 1
      %p119 = scmp.eq.s32.totalorder %s18, 1
      %p120 = scmp.ne.s32.totalorder %s115, %s117
      %p121 = scmp.eq.s32.totalorder %s18, 0
      %p122 = por %p120, %p121
      %p123 = scmp.ne.s32.totalorder %s115, %s117
      %p124 = scmp.eq.s32.totalorder %s23, 1
      %p125 = por %p123, %p124
      %p126 = scmp.ne.s32.totalorder %s117, %s118
      %p127 = scmp.eq.s32.totalorder %s23, 0
      %p128 = por %p126, %p127
      %p129 = scmp.ne.s32.totalorder %s117, %s118
      %p130 = scmp.eq.s32.totalorder %s24, 1
      %p131 = por %p129, %p130
      %p133 = scmp.ne.s32.totalorder %s118, %s132
      %p134 = scmp.eq.s32.totalorder %s24, 0
      %p135 = por %p133, %p134
      %s136 = ssub.s32 %s18, %s25
      %p137 = scmp.eq.s32.totalorder %s136, 0
      %s139 = sadd.s32 %s138, 1
      %s140 = scalar_select %p137, %s138, %s139
      %p143 = pneg %p137
      %p144 = scmp.eq.s32.totalorder %s18, 1
      %p145 = por %p143, %p144
      %p146 = scmp.ne.s32.totalorder %s138, %s141
      %p147 = scmp.eq.s32.totalorder %s18, 0
      %p148 = por %p146, %p147
      %p149 = scmp.ne.s32.totalorder %s138, %s141
      %p150 = scmp.eq.s32.totalorder %s23, 1
      %p151 = por %p149, %p150
      %p152 = scmp.ne.s32.totalorder %s141, %s142
      %p153 = scmp.eq.s32.totalorder %s23, 0
      %p154 = por %p152, %p153
      %p155 = scmp.ne.s32.totalorder %s141, %s142
      %p156 = scmp.eq.s32.totalorder %s24, 1
      %p157 = por %p155, %p156
      %p159 = scmp.ne.s32.totalorder %s142, %s158
      %p160 = scmp.eq.s32.totalorder %s24, 0
      %p161 = por %p159, %p160
      %p162 = scmp.le.s32.totalorder 1, %s18
      %p163 = scmp.lt.s32.totalorder %s18, 3
      %p164 = pnand %p162, %p163
      %p165 = pneg %p164
      // Predicated region
      $region9: #{tpu_custom_call.1} parent=5 // pred_check
        _
      $region10: #{tpu_custom_call.1} parent=5 // pred_check_branch
        %167 = sbr.rel (%p164) target = $region12
      $region11: #{tpu_custom_call.1} parent=5 // pred_region
        %s168 = ssub.s32 %s18, 1
        // Predicated region
        $region13: #{tpu_custom_call.1} parent=11 // pred_check
          %p169 = pneg %p65
        $region14: #{tpu_custom_call.1} parent=11 // pred_check_branch
          %171 = sbr.rel (%p169) target = $region16
        $region15: #{tpu_custom_call.1} parent=11 // pred_region
          %s173 = ssub.s32 3072, 3072
          %174 = vsyncadd [#allocation8], %s173
          %s175 = sshll.u32 [#allocation7], 4
          %s176 = int_to_ptr.vmem [resolvable:$true] %s175
          %181 = dma.hbm_to_vmem [thread:$0]  %s1, 3072, %s176, [#allocation8], 64, 64, 4
        $region16: #{tpu_custom_call.1} parent=11 // pred_fallthru
          _
        // Predicated region
        $region17: #{tpu_custom_call.1} parent=11 // pred_check
          %p182 = pneg %p86
        $region18: #{tpu_custom_call.1} parent=11 // pred_check_branch
          %184 = sbr.rel (%p182) target = $region20
        $region19: #{tpu_custom_call.1} parent=11 // pred_region
          %s186 = ssub.s32 3072, 3072
          %187 = vsyncadd [#allocation8], %s186
          %s188 = sshll.u32 [#allocation9], 4
          %s189 = int_to_ptr.vmem [resolvable:$true] %s188
          %194 = dma.hbm_to_vmem [thread:$0]  %s2, 3072, %s189, [#allocation8], 64, 64, 4
        $region20: #{tpu_custom_call.1} parent=11 // pred_fallthru
          _
        // Predicated region
        $region21: #{tpu_custom_call.1} parent=11 // pred_check
          %p195 = pneg %p107
        $region22: #{tpu_custom_call.1} parent=11 // pred_check_branch
          %197 = sbr.rel (%p195) target = $region24
        $region23: #{tpu_custom_call.1} parent=11 // pred_region
          _
        $region24: #{tpu_custom_call.1} parent=11 // pred_fallthru
          _
        // Predicated region
        $region25: #{tpu_custom_call.1} parent=11 // pred_check
          %p198 = pneg %p128
        $region26: #{tpu_custom_call.1} parent=11 // pred_check_branch
          %200 = sbr.rel (%p198) target = $region28
        $region27: #{tpu_custom_call.1} parent=11 // pred_region
          _
        $region28: #{tpu_custom_call.1} parent=11 // pred_fallthru
          _
      $region12: #{tpu_custom_call.1} parent=5 // pred_fallthru
        _
      %p201 = scmp.lt.s32.totalorder %s18, 2
      // Predicated region
      $region29: #{tpu_custom_call.1} parent=5 // pred_check
        %p202 = pneg %p201
      $region30: #{tpu_custom_call.1} parent=5 // pred_check_branch
        %204 = sbr.rel (%p202) target = $region32
      $region31: #{tpu_custom_call.1} parent=5 // pred_region
        // Predicated region
        $region33: #{tpu_custom_call.1} parent=31 // pred_check
          %p205 = pneg %p38
        $region34: #{tpu_custom_call.1} parent=31 // pred_check_branch
          %207 = sbr.rel (%p205) target = $region36
        $region35: #{tpu_custom_call.1} parent=31 // pred_region
          %s208 = sand.u32 %s28, 1
          %s209 = scalar_lea.sflag [#allocation5], %s208
          %s210 = sand.u32 %s28, 1
          %s211 = smul.addr %s210, 64
          %s212 = scalar_lea.vmem [#allocation4], %s211
          %s213 = smul.u32 4, %s18
          %s215 = ssub.s32 1024, 1024
          %216 = vsyncadd %s209, %s215
          %s217 = smul.addr %s213, 2
          %s218 = smul.addr %s217, 128
          %s219 = scalar_lea.hbm %s0, %s218
          %s220 = sshll.u32 %s212, 4
          %s221 = int_to_ptr.vmem [resolvable:$true] %s220
          %226 = dma.hbm_to_vmem [thread:$0]  %s219, 1024, %s221, %s209, 128, 128, 8
        $region36: #{tpu_custom_call.1} parent=31 // pred_fallthru
          _
      $region32: #{tpu_custom_call.1} parent=5 // pred_fallthru
        _
      %p227 = scmp.le.s32.totalorder 1, %s18
      %p228 = scmp.lt.s32.totalorder %s18, 3
      %p229 = pnand %p227, %p228
      %p230 = pneg %p229
      // Predicated region
      $region37: #{tpu_custom_call.1} parent=5 // pred_check
        _
      $region38: #{tpu_custom_call.1} parent=5 // pred_check_branch
        %232 = sbr.rel (%p229) target = $region40
      $region39: #{tpu_custom_call.1} parent=5 // pred_region
        %s233 = ssub.s32 %s18, 1
        %s234 = sand.u32 %s31, 1
        %s235 = scalar_lea.sflag [#allocation5], %s234
        %s236 = sand.u32 %s31, 1
        %s237 = smul.addr %s236, 64
        %s238 = scalar_lea.vmem [#allocation4], %s237
        // Predicated region
        $region41: #{tpu_custom_call.1} parent=39 // pred_check
          %p239 = pneg %p44
        $region42: #{tpu_custom_call.1} parent=39 // pred_check_branch
          %241 = sbr.rel (%p239) target = $region44
        $region43: #{tpu_custom_call.1} parent=39 // pred_region
          %242 = dma.done %s235, 1024
        $region44: #{tpu_custom_call.1} parent=39 // pred_fallthru
          _
        // Predicated region
        $region45: #{tpu_custom_call.1} parent=39 // pred_check
          %p243 = pneg %p65
        $region46: #{tpu_custom_call.1} parent=39 // pred_check_branch
          %245 = sbr.rel (%p243) target = $region48
        $region47: #{tpu_custom_call.1} parent=39 // pred_region
          %246 = dma.done [#allocation8], 3072
        $region48: #{tpu_custom_call.1} parent=39 // pred_fallthru
          _
        // Predicated region
        $region49: #{tpu_custom_call.1} parent=39 // pred_check
          %p247 = pneg %p86
        $region50: #{tpu_custom_call.1} parent=39 // pred_check_branch
          %249 = sbr.rel (%p247) target = $region52
        $region51: #{tpu_custom_call.1} parent=39 // pred_region
          %250 = dma.done [#allocation8], 3072
        $region52: #{tpu_custom_call.1} parent=39 // pred_fallthru
          _
        %s251 = sand.u32 %s31, 1
        %s252 = scalar_lea.sflag [#allocation5], %s251
        %s253 = sand.u32 %s31, 1
        %s254 = smul.addr %s253, 64
        %s255 = scalar_lea.vmem [#allocation4], %s254
        %p256 = pneg %p44
        %p257 = pneg %p41
        %p258 = pneg %p65
        %p259 = pneg %p62
        %p260 = pneg %p86
        %p261 = pneg %p83
        %p262 = pneg %p107
        %p263 = pneg %p104
        %p264 = pneg %p128
        %p265 = pneg %p125
        %p266 = pneg %p154
        %p267 = pneg %p151
        %s268 = sand.u32 %s141, 1
        %s269 = scalar_lea.sflag [#allocation6], %s268
        %s270 = sand.u32 %s141, 1
        %s271 = smul.addr %s270, 64
        %s272 = scalar_lea.vmem [#allocation10], %s271
        %s273 = smul.u32 4, %s23
        %s274 = smul.u32 4, %s23
        %276 = vst [vmem:[#allocation2] sm:$0xff] 0.0
        %277 = vst [vmem:[#allocation2 + $0x18] sm:$0xff] 0.0
        %278 = vst [vmem:[#allocation2 + $0x30] sm:$0xff] 0.0
        %279 = vst [vmem:[#allocation2 + $0x48] sm:$0xff] 0.0
        %280 = vst [vmem:[#allocation2 + $0x60] sm:$0xff] 0.0
        %v281 = vld [vmem:[%s238] sm:$0xff]
        %v282 = vld [vmem:[%s238 + $0x8] sm:$0xff]
        %283 = vst [vmem:[#allocation2 + $0x8] sm:$0xff] %v281
        %284 = vst [vmem:[#allocation2 + $0x10] sm:$0xff] %v282
        %s285 = scalar_lea.vmem %s238, 16 [#allocation4]
        %v286 = vld [vmem:[%s285] sm:$0xff]
        %v287 = vld [vmem:[%s285 + $0x8] sm:$0xff]
        %288 = vst [vmem:[#allocation2 + $0x20] sm:$0xff] %v286
        %289 = vst [vmem:[#allocation2 + $0x28] sm:$0xff] %v287
        %s290 = scalar_lea.vmem %s238, 32 [#allocation4]
        %v291 = vld [vmem:[%s290] sm:$0xff]
        %v292 = vld [vmem:[%s290 + $0x8] sm:$0xff]
        %293 = vst [vmem:[#allocation2 + $0x38] sm:$0xff] %v291
        %294 = vst [vmem:[#allocation2 + $0x40] sm:$0xff] %v292
        %s295 = scalar_lea.vmem %s238, 48 [#allocation4]
        %v296 = vld [vmem:[%s295] sm:$0xff]
        %v297 = vld [vmem:[%s295 + $0x8] sm:$0xff]
        %298 = vst [vmem:[#allocation2 + $0x50] sm:$0xff] %v296
        %299 = vst [vmem:[#allocation2 + $0x58] sm:$0xff] %v297
        %v300 = vld [vmem:[#allocation2 + $0x7] sm:$0xff]
        %v301 = vld [vmem:[#allocation2 + $0xf] sm:$0xff]
        %v302 = vld [vmem:[#allocation2 + $0x17] sm:$0xff]
        %v303 = vld [vmem:[#allocation2 + $0x1f] sm:$0xff]
        %v304 = vld [vmem:[#allocation2 + $0x27] sm:$0xff]
        %v305 = vld [vmem:[#allocation2 + $0x2f] sm:$0xff]
        %v306 = vld [vmem:[#allocation2 + $0x37] sm:$0xff]
        %v307 = vld [vmem:[#allocation2 + $0x3f] sm:$0xff]
        %v308 = vld [vmem:[#allocation2 + $0x47] sm:$0xff]
        %v309 = vld [vmem:[#allocation2 + $0x4f] sm:$0xff]
        %v310 = vld [vmem:[#allocation2 + $0x57] sm:$0xff]
        %v311 = vpack.c.bf16 %v301, %v300
        %v312 = vpack.c.bf16 %v303, %v302
        %v313 = vpack.c.bf16 %v305, %v304
        %v314 = vpack.c.bf16 %v307, %v306
        %v315 = vpack.c.bf16 %v309, %v308
        %v316 = vpack.c.bf16 %v310, %v310
        %v317 = vld [vmem:[#allocation7] sm:$0xf]
        %v318 = vld [vmem:[#allocation7 + $0x4] sm:$0xf]
        %v319 = vld [vmem:[#allocation7 + $0x8] sm:$0xf]
        %v320 = vld [vmem:[#allocation7 + $0xc] sm:$0xf]
        %v321 = vld [vmem:[#allocation7 + $0x10] sm:$0xf]
        %v322 = vld [vmem:[#allocation7 + $0x14] sm:$0xf]
        %v323 = vld [vmem:[#allocation7 + $0x18] sm:$0xf]
        %v324 = vld [vmem:[#allocation7 + $0x1c] sm:$0xf]
        %v325 = vld [vmem:[#allocation7 + $0x20] sm:$0xf]
        %v326 = vld [vmem:[#allocation7 + $0x24] sm:$0xf]
        %v327 = vld [vmem:[#allocation7 + $0x28] sm:$0xf]
        %v328 = vld [vmem:[#allocation7 + $0x2c] sm:$0xf]
        %v329 = vld [vmem:[#allocation7 + $0x30] sm:$0xf]
        %v330 = vld [vmem:[#allocation7 + $0x34] sm:$0xf]
        %v331 = vld [vmem:[#allocation7 + $0x38] sm:$0xf]
        %v332 = vld [vmem:[#allocation7 + $0x3c] sm:$0xf]
        %v333 = vld [vmem:[%s3] sm:$0x1]
        %v335 = vlaneseq
        %v336 = vshrl.u32 %v335, 7
        %v337 = vsub.s32 0, %v336
        %v338 = vrot.slane %v333, %v337
        %v356 = vunpack.c.l.b16 %v317
        %v357 = vunpack.c.l.b16 %v318
        %v358 = vunpack.c.l.b16 %v319
        %v359 = vunpack.c.l.b16 %v320
        %v360 = vunpack.c.l.b16 %v321
        %v361 = vunpack.c.l.b16 %v322
        %v362 = vunpack.c.l.b16 %v323
        %v363 = vunpack.c.l.b16 %v324
        %v364 = vunpack.c.l.b16 %v325
        %v365 = vunpack.c.l.b16 %v326
        %v366 = vunpack.c.l.b16 %v327
        %v367 = vunpack.c.l.b16 %v328
        %v368 = vunpack.c.l.b16 %v329
        %v369 = vunpack.c.l.b16 %v330
        %v370 = vunpack.c.l.b16 %v331
        %v371 = vunpack.c.l.b16 %v332
        %v372 = vpack.c.b16 %v357, %v356
        %v373 = vpack.c.b16 %v359, %v358
        %v374 = vpack.c.b16 %v361, %v360
        %v375 = vpack.c.b16 %v363, %v362
        %v376 = vpack.c.b16 %v365, %v364
        %v377 = vpack.c.b16 %v367, %v366
        %v378 = vpack.c.b16 %v369, %v368
        %v379 = vpack.c.b16 %v371, %v370
        %388 = vmatprep.subr.bf16.mxu0 0
        %389 = vmatpush1.bf16.msra.mxu0 %v372
        %390 = vmatprep.subr.bf16.mxu0 0
        %391 = vmatpush1.bf16.msra.mxu0 %v373
        %392 = vmatprep.subr.bf16.mxu0 0
        %393 = vmatpush1.bf16.msra.mxu0 %v374
        %394 = vmatprep.subr.bf16.mxu0 0
        %395 = vmatpush1.bf16.msra.mxu0 %v375
        %396 = vmatprep.subr.bf16.mxu0 0
        %397 = vmatpush1.bf16.msra.mxu0 %v376
        %398 = vmatprep.subr.bf16.mxu0 0
        %399 = vmatpush1.bf16.msra.mxu0 %v377
        %400 = vmatprep.subr.bf16.mxu0 0
        %401 = vmatpush1.bf16.msra.mxu0 %v378
        %402 = vmatprep.subr.bf16.mxu0 0
        %403 = vmatpush1.bf16.msra.mxu0 %v379
        %404 = vmatprep.subr.bf16.mxu0 0
        %405 = vmatpush1.bf16.msra.mxu0 0
        %406 = vmatprep.subr.bf16.mxu0 0
        %407 = vmatpush1.bf16.msra.mxu0 0
        %408 = vmatprep.subr.bf16.mxu0 0
        %409 = vmatpush1.bf16.msra.mxu0 0
        %410 = vmatprep.subr.bf16.mxu0 0
        %411 = vmatpush1.bf16.msra.mxu0 0
        %412 = vmatprep.subr.bf16.mxu0 0
        %413 = vmatpush1.bf16.msra.mxu0 0
        %414 = vmatprep.subr.bf16.mxu0 0
        %415 = vmatpush1.bf16.msra.mxu0 0
        %416 = vmatprep.subr.bf16.mxu0 0
        %417 = vmatpush1.bf16.msra.mxu0 0
        %418 = vmatprep.subr.bf16.mxu0 0
        %419 = vmatpush1.bf16.msra.mxu0 0
        %420 = vmatprep.mubr.bf16.mxu0 0
        %421 = vmatmul.mubr.bf16.gmra.mrb[0].mxu0 %v311
        %v422 = vpop.f32.mrb[0].mxu0
        %v423 = vadd.f32 %v338, %v422
        %v424 = vpop.f32.mrb[0].mxu0
        %v425 = vpop.f32.mrb[0].mxu0
        %v426 = vadd.f32 %v338, %v425
        %v427 = vpop.f32.mrb[0].mxu0
        %428 = vmatprep.mubr.bf16.mxu0 0
        %429 = vmatmul.mubr.bf16.gmra.mrb[0].mxu0 %v312
        %v430 = vpop.f32.mrb[0].mxu0
        %v431 = vadd.f32 %v338, %v430
        %v432 = vpop.f32.mrb[0].mxu0
        %v433 = vpop.f32.mrb[0].mxu0
        %v434 = vadd.f32 %v338, %v433
        %v435 = vpop.f32.mrb[0].mxu0
        %436 = vmatprep.mubr.bf16.mxu0 0
        %437 = vmatmul.mubr.bf16.gmra.mrb[0].mxu0 %v313
        %v438 = vpop.f32.mrb[0].mxu0
        %v439 = vadd.f32 %v338, %v438
        %v440 = vpop.f32.mrb[0].mxu0
        %v441 = vpop.f32.mrb[0].mxu0
        %v442 = vadd.f32 %v338, %v441
        %v443 = vpop.f32.mrb[0].mxu0
        %444 = vmatprep.mubr.bf16.mxu0 0
        %445 = vmatmul.mubr.bf16.gmra.mrb[0].mxu0 %v314
        %v446 = vpop.f32.mrb[0].mxu0
        %v447 = vadd.f32 %v338, %v446
        %v448 = vpop.f32.mrb[0].mxu0
        %v449 = vpop.f32.mrb[0].mxu0
        %v450 = vadd.f32 %v338, %v449
        %v451 = vpop.f32.mrb[0].mxu0
        %452 = vmatprep.mubr.bf16.mxu0 0
        %453 = vmatmul.mubr.bf16.gmra.mrb[0].mxu0 %v315
        %v454 = vpop.f32.mrb[0].mxu0
        %v455 = vadd.f32 %v338, %v454
        %v456 = vpop.f32.mrb[0].mxu0
        %v457 = vpop.f32.mrb[0].mxu0
        %v458 = vadd.f32 %v338, %v457
        %v459 = vpop.f32.mrb[0].mxu0
        %460 = vmatprep.mubr.bf16.mxu0 0
        %461 = vmatmul.mubr.bf16.gmra.mrb[0].mxu0 %v316
        %v462 = vpop.f32.mrb[0].mxu0
        %v463 = vadd.f32 %v338, %v462
        %v464 = vpop.f32.mrb[0].mxu0
        %v465 = vpop.f32.mrb[0].mxu0
        %v466 = vpop.f32.mrb[0].mxu0
        %467 = vdwg.mxu0
        %v468 = vld [vmem:[#allocation2 + $0x8] sm:$0xff]
        %v469 = vld [vmem:[#allocation2 + $0x10] sm:$0xff]
        %v470 = vld [vmem:[#allocation2 + $0x18] sm:$0xff]
        %v471 = vld [vmem:[#allocation2 + $0x20] sm:$0xff]
        %v472 = vld [vmem:[#allocation2 + $0x28] sm:$0xff]
        %v473 = vld [vmem:[#allocation2 + $0x30] sm:$0xff]
        %v474 = vld [vmem:[#allocation2 + $0x38] sm:$0xff]
        %v475 = vld [vmem:[#allocation2 + $0x40] sm:$0xff]
        %v476 = vld [vmem:[#allocation2 + $0x48] sm:$0xff]
        %v477 = vld [vmem:[#allocation2 + $0x50] sm:$0xff]
        %v478 = vld [vmem:[#allocation2 + $0x58] sm:$0xff]
        %v479 = vpack.c.bf16 %v469, %v468
        %v480 = vpack.c.bf16 %v471, %v470
        %v481 = vpack.c.bf16 %v473, %v472
        %v482 = vpack.c.bf16 %v475, %v474
        %v483 = vpack.c.bf16 %v477, %v476
        %v484 = vpack.c.bf16 %v478, %v478
        %s485 = scalar_lea.vmem [#allocation7], 64
        %v486 = vld [vmem:[%s485] sm:$0xf]
        %v487 = vld [vmem:[%s485 + $0x4] sm:$0xf]
        %v488 = vld [vmem:[%s485 + $0x8] sm:$0xf]
        %v489 = vld [vmem:[%s485 + $0xc] sm:$0xf]
        %v490 = vld [vmem:[%s485 + $0x10] sm:$0xf]
        %v491 = vld [vmem:[%s485 + $0x14] sm:$0xf]
        %v492 = vld [vmem:[%s485 + $0x18] sm:$0xf]
        %v493 = vld [vmem:[%s485 + $0x1c] sm:$0xf]
        %v494 = vld [vmem:[%s485 + $0x20] sm:$0xf]
        %v495 = vld [vmem:[%s485 + $0x24] sm:$0xf]
        %v496 = vld [vmem:[%s485 + $0x28] sm:$0xf]
        %v497 = vld [vmem:[%s485 + $0x2c] sm:$0xf]
        %v498 = vld [vmem:[%s485 + $0x30] sm:$0xf]
        %v499 = vld [vmem:[%s485 + $0x34] sm:$0xf]
        %v500 = vld [vmem:[%s485 + $0x38] sm:$0xf]
        %v501 = vld [vmem:[%s485 + $0x3c] sm:$0xf]
        %v518 = vunpack.c.l.b16 %v486
        %v519 = vunpack.c.l.b16 %v487
        %v520 = vunpack.c.l.b16 %v488
        %v521 = vunpack.c.l.b16 %v489
        %v522 = vunpack.c.l.b16 %v490
        %v523 = vunpack.c.l.b16 %v491
        %v524 = vunpack.c.l.b16 %v492
        %v525 = vunpack.c.l.b16 %v493
        %v526 = vunpack.c.l.b16 %v494
        %v527 = vunpack.c.l.b16 %v495
        %v528 = vunpack.c.l.b16 %v496
        %v529 = vunpack.c.l.b16 %v497
        %v530 = vunpack.c.l.b16 %v498
        %v531 = vunpack.c.l.b16 %v499
        %v532 = vunpack.c.l.b16 %v500
        %v533 = vunpack.c.l.b16 %v501
        %v534 = vpack.c.b16 %v519, %v518
        %v535 = vpack.c.b16 %v521, %v520
        %v536 = vpack.c.b16 %v523, %v522
        %v537 = vpack.c.b16 %v525, %v524
        %v538 = vpack.c.b16 %v527, %v526
        %v539 = vpack.c.b16 %v529, %v528
        %v540 = vpack.c.b16 %v531, %v530
        %v541 = vpack.c.b16 %v533, %v532
        %550 = vmatprep.subr.bf16.mxu0 0
        %551 = vmatpush1.bf16.msra.mxu0 %v534
        %552 = vmatprep.subr.bf16.mxu0 0
        %553 = vmatpush1.bf16.msra.mxu0 %v535
        %554 = vmatprep.subr.bf16.mxu0 0
        %555 = vmatpush1.bf16.msra.mxu0 %v536
        %556 = vmatprep.subr.bf16.mxu0 0
        %557 = vmatpush1.bf16.msra.mxu0 %v537
        %558 = vmatprep.subr.bf16.mxu0 0
        %559 = vmatpush1.bf16.msra.mxu0 %v538
        %560 = vmatprep.subr.bf16.mxu0 0
        %561 = vmatpush1.bf16.msra.mxu0 %v539
        %562 = vmatprep.subr.bf16.mxu0 0
        %563 = vmatpush1.bf16.msra.mxu0 %v540
        %564 = vmatprep.subr.bf16.mxu0 0
        %565 = vmatpush1.bf16.msra.mxu0 %v541
        %566 = vmatprep.subr.bf16.mxu0 0
        %567 = vmatpush1.bf16.msra.mxu0 0
        %568 = vmatprep.subr.bf16.mxu0 0
        %569 = vmatpush1.bf16.msra.mxu0 0
        %570 = vmatprep.subr.bf16.mxu0 0
        %571 = vmatpush1.bf16.msra.mxu0 0
        %572 = vmatprep.subr.bf16.mxu0 0
        %573 = vmatpush1.bf16.msra.mxu0 0
        %574 = vmatprep.subr.bf16.mxu0 0
        %575 = vmatpush1.bf16.msra.mxu0 0
        %576 = vmatprep.subr.bf16.mxu0 0
        %577 = vmatpush1.bf16.msra.mxu0 0
        %578 = vmatprep.subr.bf16.mxu0 0
        %579 = vmatpush1.bf16.msra.mxu0 0
        %580 = vmatprep.subr.bf16.mxu0 0
        %581 = vmatpush1.bf16.msra.mxu0 0
        %582 = vmatprep.mubr.bf16.mxu0 0
        %583 = vmatmul.mubr.bf16.gmra.mrb[0].mxu0 %v479
        %v584 = vpop.f32.mrb[0].mxu0
        %v585 = vadd.f32 0.0, %v584
        %v586 = vpop.f32.mrb[0].mxu0
        %v587 = vpop.f32.mrb[0].mxu0
        %v588 = vadd.f32 0.0, %v587
        %v589 = vpop.f32.mrb[0].mxu0
        %590 = vmatprep.mubr.bf16.mxu0 0
        %591 = vmatmul.mubr.bf16.gmra.mrb[0].mxu0 %v480
        %v592 = vpop.f32.mrb[0].mxu0
        %v593 = vadd.f32 0.0, %v592
        %v594 = vpop.f32.mrb[0].mxu0
        %v595 = vpop.f32.mrb[0].mxu0
        %v596 = vadd.f32 0.0, %v595
        %v597 = vpop.f32.mrb[0].mxu0
        %598 = vmatprep.mubr.bf16.mxu0 0
        %599 = vmatmul.mubr.bf16.gmra.mrb[0].mxu0 %v481
        %v600 = vpop.f32.mrb[0].mxu0
        %v601 = vadd.f32 0.0, %v600
        %v602 = vpop.f32.mrb[0].mxu0
        %v603 = vpop.f32.mrb[0].mxu0
        %v604 = vadd.f32 0.0, %v603
        %v605 = vpop.f32.mrb[0].mxu0
        %606 = vmatprep.mubr.bf16.mxu0 0
        %607 = vmatmul.mubr.bf16.gmra.mrb[0].mxu0 %v482
        %v608 = vpop.f32.mrb[0].mxu0
        %v609 = vadd.f32 0.0, %v608
        %v610 = vpop.f32.mrb[0].mxu0
        %v611 = vpop.f32.mrb[0].mxu0
        %v612 = vadd.f32 0.0, %v611
        %v613 = vpop.f32.mrb[0].mxu0
        %614 = vmatprep.mubr.bf16.mxu0 0
        %615 = vmatmul.mubr.bf16.gmra.mrb[0].mxu0 %v483
        %v616 = vpop.f32.mrb[0].mxu0
        %v617 = vadd.f32 0.0, %v616
        %v618 = vpop.f32.mrb[0].mxu0
        %v619 = vpop.f32.mrb[0].mxu0
        %v620 = vadd.f32 0.0, %v619
        %v621 = vpop.f32.mrb[0].mxu0
        %622 = vmatprep.mubr.bf16.mxu0 0
        %623 = vmatmul.mubr.bf16.gmra.mrb[0].mxu0 %v484
        %v624 = vpop.f32.mrb[0].mxu0
        %v625 = vadd.f32 0.0, %v624
        %v626 = vpop.f32.mrb[0].mxu0
        %v627 = vpop.f32.mrb[0].mxu0
        %v628 = vpop.f32.mrb[0].mxu0
        %629 = vdwg.mxu0
        %v630 = vadd.f32 %v423, %v585
        %v631 = vadd.f32 %v426, %v588
        %v632 = vadd.f32 %v431, %v593
        %v633 = vadd.f32 %v434, %v596
        %v634 = vadd.f32 %v439, %v601
        %v635 = vadd.f32 %v442, %v604
        %v636 = vadd.f32 %v447, %v609
        %v637 = vadd.f32 %v450, %v612
        %v638 = vadd.f32 %v455, %v617
        %v639 = vadd.f32 %v458, %v620
        %v640 = vadd.f32 %v463, %v625
        %v641 = vld [vmem:[#allocation2 + $0x9] sm:$0xff]
        %v642 = vld [vmem:[#allocation2 + $0x11] sm:$0xff]
        %v643 = vld [vmem:[#allocation2 + $0x19] sm:$0xff]
        %v644 = vld [vmem:[#allocation2 + $0x21] sm:$0xff]
        %v645 = vld [vmem:[#allocation2 + $0x29] sm:$0xff]
        %v646 = vld [vmem:[#allocation2 + $0x31] sm:$0xff]
        %v647 = vld [vmem:[#allocation2 + $0x39] sm:$0xff]
        %v648 = vld [vmem:[#allocation2 + $0x41] sm:$0xff]
        %v649 = vld [vmem:[#allocation2 + $0x49] sm:$0xff]
        %v650 = vld [vmem:[#allocation2 + $0x51] sm:$0xff]
        %v651 = vld [vmem:[#allocation2 + $0x59] sm:$0xff]
        %v652 = vpack.c.bf16 %v642, %v641
        %v653 = vpack.c.bf16 %v644, %v643
        %v654 = vpack.c.bf16 %v646, %v645
        %v655 = vpack.c.bf16 %v648, %v647
        %v656 = vpack.c.bf16 %v650, %v649
        %v657 = vpack.c.bf16 %v651, %v651
        %s658 = scalar_lea.vmem [#allocation7], 128
        %v659 = vld [vmem:[%s658] sm:$0xf]
        %v660 = vld [vmem:[%s658 + $0x4] sm:$0xf]
        %v661 = vld [vmem:[%s658 + $0x8] sm:$0xf]
        %v662 = vld [vmem:[%s658 + $0xc] sm:$0xf]
        %v663 = vld [vmem:[%s658 + $0x10] sm:$0xf]
        %v664 = vld [vmem:[%s658 + $0x14] sm:$0xf]
        %v665 = vld [vmem:[%s658 + $0x18] sm:$0xf]
        %v666 = vld [vmem:[%s658 + $0x1c] sm:$0xf]
        %v667 = vld [vmem:[%s658 + $0x20] sm:$0xf]
        %v668 = vld [vmem:[%s658 + $0x24] sm:$0xf]
        %v669 = vld [vmem:[%s658 + $0x28] sm:$0xf]
        %v670 = vld [vmem:[%s658 + $0x2c] sm:$0xf]
        %v671 = vld [vmem:[%s658 + $0x30] sm:$0xf]
        %v672 = vld [vmem:[%s658 + $0x34] sm:$0xf]
        %v673 = vld [vmem:[%s658 + $0x38] sm:$0xf]
        %v674 = vld [vmem:[%s658 + $0x3c] sm:$0xf]
        %v691 = vunpack.c.l.b16 %v659
        %v692 = vunpack.c.l.b16 %v660
        %v693 = vunpack.c.l.b16 %v661
        %v694 = vunpack.c.l.b16 %v662
        %v695 = vunpack.c.l.b16 %v663
        %v696 = vunpack.c.l.b16 %v664
        %v697 = vunpack.c.l.b16 %v665
        %v698 = vunpack.c.l.b16 %v666
        %v699 = vunpack.c.l.b16 %v667
        %v700 = vunpack.c.l.b16 %v668
        %v701 = vunpack.c.l.b16 %v669
        %v702 = vunpack.c.l.b16 %v670
        %v703 = vunpack.c.l.b16 %v671
        %v704 = vunpack.c.l.b16 %v672
        %v705 = vunpack.c.l.b16 %v673
        %v706 = vunpack.c.l.b16 %v674
        %v707 = vpack.c.b16 %v692, %v691
        %v708 = vpack.c.b16 %v694, %v693
        %v709 = vpack.c.b16 %v696, %v695
        %v710 = vpack.c.b16 %v698, %v697
        %v711 = vpack.c.b16 %v700, %v699
        %v712 = vpack.c.b16 %v702, %v701
        %v713 = vpack.c.b16 %v704, %v703
        %v714 = vpack.c.b16 %v706, %v705
        %723 = vmatprep.subr.bf16.mxu0 0
        %724 = vmatpush1.bf16.msra.mxu0 %v707
        %725 = vmatprep.subr.bf16.mxu0 0
        %726 = vmatpush1.bf16.msra.mxu0 %v708
        %727 = vmatprep.subr.bf16.mxu0 0
        %728 = vmatpush1.bf16.msra.mxu0 %v709
        %729 = vmatprep.subr.bf16.mxu0 0
        %730 = vmatpush1.bf16.msra.mxu0 %v710
        %731 = vmatprep.subr.bf16.mxu0 0
        %732 = vmatpush1.bf16.msra.mxu0 %v711
        %733 = vmatprep.subr.bf16.mxu0 0
        %734 = vmatpush1.bf16.msra.mxu0 %v712
        %735 = vmatprep.subr.bf16.mxu0 0
        %736 = vmatpush1.bf16.msra.mxu0 %v713
        %737 = vmatprep.subr.bf16.mxu0 0
        %738 = vmatpush1.bf16.msra.mxu0 %v714
        %739 = vmatprep.subr.bf16.mxu0 0
        %740 = vmatpush1.bf16.msra.mxu0 0
        %741 = vmatprep.subr.bf16.mxu0 0
        %742 = vmatpush1.bf16.msra.mxu0 0
        %743 = vmatprep.subr.bf16.mxu0 0
        %744 = vmatpush1.bf16.msra.mxu0 0
        %745 = vmatprep.subr.bf16.mxu0 0
        %746 = vmatpush1.bf16.msra.mxu0 0
        %747 = vmatprep.subr.bf16.mxu0 0
        %748 = vmatpush1.bf16.msra.mxu0 0
        %749 = vmatprep.subr.bf16.mxu0 0
        %750 = vmatpush1.bf16.msra.mxu0 0
        %751 = vmatprep.subr.bf16.mxu0 0
        %752 = vmatpush1.bf16.msra.mxu0 0
        %753 = vmatprep.subr.bf16.mxu0 0
        %754 = vmatpush1.bf16.msra.mxu0 0
        %755 = vmatprep.mubr.bf16.mxu0 0
        %756 = vmatmul.mubr.bf16.gmra.mrb[0].mxu0 %v652
        %v757 = vpop.f32.mrb[0].mxu0
        %v758 = vadd.f32 0.0, %v757
        %v759 = vpop.f32.mrb[0].mxu0
        %v760 = vpop.f32.mrb[0].mxu0
        %v761 = vadd.f32 0.0, %v760
        %v762 = vpop.f32.mrb[0].mxu0
        %763 = vmatprep.mubr.bf16.mxu0 0
        %764 = vmatmul.mubr.bf16.gmra.mrb[0].mxu0 %v653
        %v765 = vpop.f32.mrb[0].mxu0
        %v766 = vadd.f32 0.0, %v765
        %v767 = vpop.f32.mrb[0].mxu0
        %v768 = vpop.f32.mrb[0].mxu0
        %v769 = vadd.f32 0.0, %v768
        %v770 = vpop.f32.mrb[0].mxu0
        %771 = vmatprep.mubr.bf16.mxu0 0
        %772 = vmatmul.mubr.bf16.gmra.mrb[0].mxu0 %v654
        %v773 = vpop.f32.mrb[0].mxu0
        %v774 = vadd.f32 0.0, %v773
        %v775 = vpop.f32.mrb[0].mxu0
        %v776 = vpop.f32.mrb[0].mxu0
        %v777 = vadd.f32 0.0, %v776
        %v778 = vpop.f32.mrb[0].mxu0
        %779 = vmatprep.mubr.bf16.mxu0 0
        %780 = vmatmul.mubr.bf16.gmra.mrb[0].mxu0 %v655
        %v781 = vpop.f32.mrb[0].mxu0
        %v782 = vadd.f32 0.0, %v781
        %v783 = vpop.f32.mrb[0].mxu0
        %v784 = vpop.f32.mrb[0].mxu0
        %v785 = vadd.f32 0.0, %v784
        %v786 = vpop.f32.mrb[0].mxu0
        %787 = vmatprep.mubr.bf16.mxu0 0
        %788 = vmatmul.mubr.bf16.gmra.mrb[0].mxu0 %v656
        %v789 = vpop.f32.mrb[0].mxu0
        %v790 = vadd.f32 0.0, %v789
        %v791 = vpop.f32.mrb[0].mxu0
        %v792 = vpop.f32.mrb[0].mxu0
        %v793 = vadd.f32 0.0, %v792
        %v794 = vpop.f32.mrb[0].mxu0
        %795 = vmatprep.mubr.bf16.mxu0 0
        %796 = vmatmul.mubr.bf16.gmra.mrb[0].mxu0 %v657
        %v797 = vpop.f32.mrb[0].mxu0
        %v798 = vadd.f32 0.0, %v797
        %v799 = vpop.f32.mrb[0].mxu0
        %v800 = vpop.f32.mrb[0].mxu0
        %v801 = vpop.f32.mrb[0].mxu0
        %802 = vdwg.mxu0
        %v803 = vadd.f32 %v630, %v758
        %v804 = vadd.f32 %v631, %v761
        %v805 = vadd.f32 %v632, %v766
        %v806 = vadd.f32 %v633, %v769
        %v807 = vadd.f32 %v634, %v774
        %v808 = vadd.f32 %v635, %v777
        %v809 = vadd.f32 %v636, %v782
        %v810 = vadd.f32 %v637, %v785
        %v811 = vadd.f32 %v638, %v790
        %v812 = vadd.f32 %v639, %v793
        %v813 = vadd.f32 %v640, %v798
        %v814 = vmax.f32 %v803, 0.0
        %v815 = vmax.f32 %v804, 0.0
        %v816 = vmax.f32 %v805, 0.0
        %v817 = vmax.f32 %v806, 0.0
        %v818 = vmax.f32 %v807, 0.0
        %v819 = vmax.f32 %v808, 0.0
        %v820 = vmax.f32 %v809, 0.0
        %v821 = vmax.f32 %v810, 0.0
        %v822 = vmax.f32 %v811, 0.0
        %v823 = vmax.f32 %v812, 0.0
        %v824 = vmax.f32 %v813, 0.0
        %825 = vst [vmem:[#allocation3 + $0x8] sm:$0xff] %v814
        %826 = vst [vmem:[#allocation3 + $0x10] sm:$0xff] %v815
        %827 = vst [vmem:[#allocation3 + $0x18] sm:$0xff] %v816
        %828 = vst [vmem:[#allocation3 + $0x20] sm:$0xff] %v817
        %829 = vst [vmem:[#allocation3 + $0x28] sm:$0xff] %v818
        %830 = vst [vmem:[#allocation3 + $0x30] sm:$0xff] %v819
        %831 = vst [vmem:[#allocation3 + $0x38] sm:$0xff] %v820
        %832 = vst [vmem:[#allocation3 + $0x40] sm:$0xff] %v821
        %833 = vst [vmem:[#allocation3 + $0x48] sm:$0xff] %v822
        %834 = vst [vmem:[#allocation3 + $0x50] sm:$0xff] %v823
        %835 = vst [vmem:[#allocation3 + $0x58] sm:$0xff] %v824
        %836 = vst [vmem:[#allocation3] sm:$0xff] 0.0
        %837 = vst [vmem:[#allocation3 + $0x18] sm:$0xff] 0.0
        %838 = vst [vmem:[#allocation3 + $0x30] sm:$0xff] 0.0
        %839 = vst [vmem:[#allocation3 + $0x48] sm:$0xff] 0.0
        %840 = vst [vmem:[#allocation3 + $0x60] sm:$0xff] 0.0
        %v841 = vld [vmem:[#allocation3 + $0x7] sm:$0xff]
        %v842 = vld [vmem:[#allocation3 + $0xf] sm:$0xff]
        %v843 = vld [vmem:[#allocation3 + $0x17] sm:$0xff]
        %v844 = vld [vmem:[#allocation3 + $0x1f] sm:$0xff]
        %v845 = vld [vmem:[#allocation3 + $0x27] sm:$0xff]
        %v846 = vld [vmem:[#allocation3 + $0x2f] sm:$0xff]
        %v847 = vld [vmem:[#allocation3 + $0x37] sm:$0xff]
        %v848 = vld [vmem:[#allocation3 + $0x3f] sm:$0xff]
        %v849 = vld [vmem:[#allocation3 + $0x47] sm:$0xff]
        %v850 = vld [vmem:[#allocation3 + $0x4f] sm:$0xff]
        %v851 = vld [vmem:[#allocation3 + $0x57] sm:$0xff]
        %v852 = vpack.c.bf16 %v842, %v841
        %v853 = vpack.c.bf16 %v844, %v843
        %v854 = vpack.c.bf16 %v846, %v845
        %v855 = vpack.c.bf16 %v848, %v847
        %v856 = vpack.c.bf16 %v850, %v849
        %v857 = vpack.c.bf16 %v851, %v851
        %v858 = vld [vmem:[#allocation9] sm:$0xf]
        %v859 = vld [vmem:[#allocation9 + $0x4] sm:$0xf]
        %v860 = vld [vmem:[#allocation9 + $0x8] sm:$0xf]
        %v861 = vld [vmem:[#allocation9 + $0xc] sm:$0xf]
        %v862 = vld [vmem:[#allocation9 + $0x10] sm:$0xf]
        %v863 = vld [vmem:[#allocation9 + $0x14] sm:$0xf]
        %v864 = vld [vmem:[#allocation9 + $0x18] sm:$0xf]
        %v865 = vld [vmem:[#allocation9 + $0x1c] sm:$0xf]
        %v866 = vld [vmem:[#allocation9 + $0x20] sm:$0xf]
        %v867 = vld [vmem:[#allocation9 + $0x24] sm:$0xf]
        %v868 = vld [vmem:[#allocation9 + $0x28] sm:$0xf]
        %v869 = vld [vmem:[#allocation9 + $0x2c] sm:$0xf]
        %v870 = vld [vmem:[#allocation9 + $0x30] sm:$0xf]
        %v871 = vld [vmem:[#allocation9 + $0x34] sm:$0xf]
        %v872 = vld [vmem:[#allocation9 + $0x38] sm:$0xf]
        %v873 = vld [vmem:[#allocation9 + $0x3c] sm:$0xf]
        %v874 = vld [vmem:[%s4] sm:$0x1]
        %v876 = vlaneseq
        %v877 = vshrl.u32 %v876, 7
        %v878 = vsub.s32 0, %v877
        %v879 = vrot.slane %v874, %v878
        %v897 = vunpack.c.l.b16 %v858
        %v898 = vunpack.c.l.b16 %v859
        %v899 = vunpack.c.l.b16 %v860
        %v900 = vunpack.c.l.b16 %v861
        %v901 = vunpack.c.l.b16 %v862
        %v902 = vunpack.c.l.b16 %v863
        %v903 = vunpack.c.l.b16 %v864
        %v904 = vunpack.c.l.b16 %v865
        %v905 = vunpack.c.l.b16 %v866
        %v906 = vunpack.c.l.b16 %v867
        %v907 = vunpack.c.l.b16 %v868
        %v908 = vunpack.c.l.b16 %v869
        %v909 = vunpack.c.l.b16 %v870
        %v910 = vunpack.c.l.b16 %v871
        %v911 = vunpack.c.l.b16 %v872
        %v912 = vunpack.c.l.b16 %v873
        %v913 = vpack.c.b16 %v898, %v897
        %v914 = vpack.c.b16 %v900, %v899
        %v915 = vpack.c.b16 %v902, %v901
        %v916 = vpack.c.b16 %v904, %v903
        %v917 = vpack.c.b16 %v906, %v905
        %v918 = vpack.c.b16 %v908, %v907
        %v919 = vpack.c.b16 %v910, %v909
        %v920 = vpack.c.b16 %v912, %v911
        %929 = vmatprep.subr.bf16.mxu0 0
        %930 = vmatpush1.bf16.msra.mxu0 %v913
        %931 = vmatprep.subr.bf16.mxu0 0
        %932 = vmatpush1.bf16.msra.mxu0 %v914
        %933 = vmatprep.subr.bf16.mxu0 0
        %934 = vmatpush1.bf16.msra.mxu0 %v915
        %935 = vmatprep.subr.bf16.mxu0 0
        %936 = vmatpush1.bf16.msra.mxu0 %v916
        %937 = vmatprep.subr.bf16.mxu0 0
        %938 = vmatpush1.bf16.msra.mxu0 %v917
        %939 = vmatprep.subr.bf16.mxu0 0
        %940 = vmatpush1.bf16.msra.mxu0 %v918
        %941 = vmatprep.subr.bf16.mxu0 0
        %942 = vmatpush1.bf16.msra.mxu0 %v919
        %943 = vmatprep.subr.bf16.mxu0 0
        %944 = vmatpush1.bf16.msra.mxu0 %v920
        %945 = vmatprep.subr.bf16.mxu0 0
        %946 = vmatpush1.bf16.msra.mxu0 0
        %947 = vmatprep.subr.bf16.mxu0 0
        %948 = vmatpush1.bf16.msra.mxu0 0
        %949 = vmatprep.subr.bf16.mxu0 0
        %950 = vmatpush1.bf16.msra.mxu0 0
        %951 = vmatprep.subr.bf16.mxu0 0
        %952 = vmatpush1.bf16.msra.mxu0 0
        %953 = vmatprep.subr.bf16.mxu0 0
        %954 = vmatpush1.bf16.msra.mxu0 0
        %955 = vmatprep.subr.bf16.mxu0 0
        %956 = vmatpush1.bf16.msra.mxu0 0
        %957 = vmatprep.subr.bf16.mxu0 0
        %958 = vmatpush1.bf16.msra.mxu0 0
        %959 = vmatprep.subr.bf16.mxu0 0
        %960 = vmatpush1.bf16.msra.mxu0 0
        %961 = vmatprep.mubr.bf16.mxu0 0
        %962 = vmatmul.mubr.bf16.gmra.mrb[0].mxu0 %v852
        %v963 = vpop.f32.mrb[0].mxu0
        %v964 = vadd.f32 %v879, %v963
        %v965 = vpop.f32.mrb[0].mxu0
        %v966 = vpop.f32.mrb[0].mxu0
        %v967 = vadd.f32 %v879, %v966
        %v968 = vpop.f32.mrb[0].mxu0
        %969 = vmatprep.mubr.bf16.mxu0 0
        %970 = vmatmul.mubr.bf16.gmra.mrb[0].mxu0 %v853
        %v971 = vpop.f32.mrb[0].mxu0
        %v972 = vpop.f32.mrb[0].mxu0
        %v973 = vpop.f32.mrb[0].mxu0
        %v974 = vadd.f32 %v879, %v973
        %v975 = vpop.f32.mrb[0].mxu0
        %976 = vmatprep.mubr.bf16.mxu0 0
        %977 = vmatmul.mubr.bf16.gmra.mrb[0].mxu0 %v854
        %v978 = vpop.f32.mrb[0].mxu0
        %v979 = vadd.f32 %v879, %v978
        %v980 = vpop.f32.mrb[0].mxu0
        %v981 = vpop.f32.mrb[0].mxu0
        %v982 = vpop.f32.mrb[0].mxu0
        %983 = vmatprep.mubr.bf16.mxu0 0
        %984 = vmatmul.mubr.bf16.gmra.mrb[0].mxu0 %v855
        %v985 = vpop.f32.mrb[0].mxu0
        %v986 = vadd.f32 %v879, %v985
        %v987 = vpop.f32.mrb[0].mxu0
        %v988 = vpop.f32.mrb[0].mxu0
        %v989 = vadd.f32 %v879, %v988
        %v990 = vpop.f32.mrb[0].mxu0
        %991 = vmatprep.mubr.bf16.mxu0 0
        %992 = vmatmul.mubr.bf16.gmra.mrb[0].mxu0 %v856
        %v993 = vpop.f32.mrb[0].mxu0
        %v994 = vpop.f32.mrb[0].mxu0
        %v995 = vpop.f32.mrb[0].mxu0
        %v996 = vadd.f32 %v879, %v995
        %v997 = vpop.f32.mrb[0].mxu0
        %998 = vmatprep.mubr.bf16.mxu0 0
        %999 = vmatmul.mubr.bf16.gmra.mrb[0].mxu0 %v857
        %v1000 = vpop.f32.mrb[0].mxu0
        %v1001 = vadd.f32 %v879, %v1000
        %v1002 = vpop.f32.mrb[0].mxu0
        %v1003 = vpop.f32.mrb[0].mxu0
        %v1004 = vpop.f32.mrb[0].mxu0
        %1005 = vdwg.mxu0
        %v1006 = vld [vmem:[#allocation3 + $0x8] sm:$0xff]
        %v1007 = vld [vmem:[#allocation3 + $0x10] sm:$0xff]
        %v1008 = vld [vmem:[#allocation3 + $0x18] sm:$0xff]
        %v1009 = vld [vmem:[#allocation3 + $0x20] sm:$0xff]
        %v1010 = vld [vmem:[#allocation3 + $0x28] sm:$0xff]
        %v1011 = vld [vmem:[#allocation3 + $0x30] sm:$0xff]
        %v1012 = vld [vmem:[#allocation3 + $0x38] sm:$0xff]
        %v1013 = vld [vmem:[#allocation3 + $0x40] sm:$0xff]
        %v1014 = vld [vmem:[#allocation3 + $0x48] sm:$0xff]
        %v1015 = vld [vmem:[#allocation3 + $0x50] sm:$0xff]
        %v1016 = vld [vmem:[#allocation3 + $0x58] sm:$0xff]
        %v1017 = vpack.c.bf16 %v1007, %v1006
        %v1018 = vpack.c.bf16 %v1009, %v1008
        %v1019 = vpack.c.bf16 %v1011, %v1010
        %v1020 = vpack.c.bf16 %v1013, %v1012
        %v1021 = vpack.c.bf16 %v1015, %v1014
        %v1022 = vpack.c.bf16 %v1016, %v1016
        %s1023 = scalar_lea.vmem [#allocation9], 64
        %v1024 = vld [vmem:[%s1023] sm:$0xf]
        %v1025 = vld [vmem:[%s1023 + $0x4] sm:$0xf]
        %v1026 = vld [vmem:[%s1023 + $0x8] sm:$0xf]
        %v1027 = vld [vmem:[%s1023 + $0xc] sm:$0xf]
        %v1028 = vld [vmem:[%s1023 + $0x10] sm:$0xf]
        %v1029 = vld [vmem:[%s1023 + $0x14] sm:$0xf]
        %v1030 = vld [vmem:[%s1023 + $0x18] sm:$0xf]
        %v1031 = vld [vmem:[%s1023 + $0x1c] sm:$0xf]
        %v1032 = vld [vmem:[%s1023 + $0x20] sm:$0xf]
        %v1033 = vld [vmem:[%s1023 + $0x24] sm:$0xf]
        %v1034 = vld [vmem:[%s1023 + $0x28] sm:$0xf]
        %v1035 = vld [vmem:[%s1023 + $0x2c] sm:$0xf]
        %v1036 = vld [vmem:[%s1023 + $0x30] sm:$0xf]
        %v1037 = vld [vmem:[%s1023 + $0x34] sm:$0xf]
        %v1038 = vld [vmem:[%s1023 + $0x38] sm:$0xf]
        %v1039 = vld [vmem:[%s1023 + $0x3c] sm:$0xf]
        %v1056 = vunpack.c.l.b16 %v1024
        %v1057 = vunpack.c.l.b16 %v1025
        %v1058 = vunpack.c.l.b16 %v1026
        %v1059 = vunpack.c.l.b16 %v1027
        %v1060 = vunpack.c.l.b16 %v1028
        %v1061 = vunpack.c.l.b16 %v1029
        %v1062 = vunpack.c.l.b16 %v1030
        %v1063 = vunpack.c.l.b16 %v1031
        %v1064 = vunpack.c.l.b16 %v1032
        %v1065 = vunpack.c.l.b16 %v1033
        %v1066 = vunpack.c.l.b16 %v1034
        %v1067 = vunpack.c.l.b16 %v1035
        %v1068 = vunpack.c.l.b16 %v1036
        %v1069 = vunpack.c.l.b16 %v1037
        %v1070 = vunpack.c.l.b16 %v1038
        %v1071 = vunpack.c.l.b16 %v1039
        %v1072 = vpack.c.b16 %v1057, %v1056
        %v1073 = vpack.c.b16 %v1059, %v1058
        %v1074 = vpack.c.b16 %v1061, %v1060
        %v1075 = vpack.c.b16 %v1063, %v1062
        %v1076 = vpack.c.b16 %v1065, %v1064
        %v1077 = vpack.c.b16 %v1067, %v1066
        %v1078 = vpack.c.b16 %v1069, %v1068
        %v1079 = vpack.c.b16 %v1071, %v1070
        %1088 = vmatprep.subr.bf16.mxu0 0
        %1089 = vmatpush1.bf16.msra.mxu0 %v1072
        %1090 = vmatprep.subr.bf16.mxu0 0
        %1091 = vmatpush1.bf16.msra.mxu0 %v1073
        %1092 = vmatprep.subr.bf16.mxu0 0
        %1093 = vmatpush1.bf16.msra.mxu0 %v1074
        %1094 = vmatprep.subr.bf16.mxu0 0
        %1095 = vmatpush1.bf16.msra.mxu0 %v1075
        %1096 = vmatprep.subr.bf16.mxu0 0
        %1097 = vmatpush1.bf16.msra.mxu0 %v1076
        %1098 = vmatprep.subr.bf16.mxu0 0
        %1099 = vmatpush1.bf16.msra.mxu0 %v1077
        %1100 = vmatprep.subr.bf16.mxu0 0
        %1101 = vmatpush1.bf16.msra.mxu0 %v1078
        %1102 = vmatprep.subr.bf16.mxu0 0
        %1103 = vmatpush1.bf16.msra.mxu0 %v1079
        %1104 = vmatprep.subr.bf16.mxu0 0
        %1105 = vmatpush1.bf16.msra.mxu0 0
        %1106 = vmatprep.subr.bf16.mxu0 0
        %1107 = vmatpush1.bf16.msra.mxu0 0
        %1108 = vmatprep.subr.bf16.mxu0 0
        %1109 = vmatpush1.bf16.msra.mxu0 0
        %1110 = vmatprep.subr.bf16.mxu0 0
        %1111 = vmatpush1.bf16.msra.mxu0 0
        %1112 = vmatprep.subr.bf16.mxu0 0
        %1113 = vmatpush1.bf16.msra.mxu0 0
        %1114 = vmatprep.subr.bf16.mxu0 0
        %1115 = vmatpush1.bf16.msra.mxu0 0
        %1116 = vmatprep.subr.bf16.mxu0 0
        %1117 = vmatpush1.bf16.msra.mxu0 0
        %1118 = vmatprep.subr.bf16.mxu0 0
        %1119 = vmatpush1.bf16.msra.mxu0 0
        %1120 = vmatprep.mubr.bf16.mxu0 0
        %1121 = vmatmul.mubr.bf16.gmra.mrb[0].mxu0 %v1017
        %v1122 = vpop.f32.mrb[0].mxu0
        %v1123 = vadd.f32 0.0, %v1122
        %v1124 = vpop.f32.mrb[0].mxu0
        %v1125 = vpop.f32.mrb[0].mxu0
        %v1126 = vadd.f32 0.0, %v1125
        %v1127 = vpop.f32.mrb[0].mxu0
        %1128 = vmatprep.mubr.bf16.mxu0 0
        %1129 = vmatmul.mubr.bf16.gmra.mrb[0].mxu0 %v1018
        %v1130 = vpop.f32.mrb[0].mxu0
        %v1131 = vpop.f32.mrb[0].mxu0
        %v1132 = vpop.f32.mrb[0].mxu0
        %v1133 = vadd.f32 0.0, %v1132
        %v1134 = vpop.f32.mrb[0].mxu0
        %1135 = vmatprep.mubr.bf16.mxu0 0
        %1136 = vmatmul.mubr.bf16.gmra.mrb[0].mxu0 %v1019
        %v1137 = vpop.f32.mrb[0].mxu0
        %v1138 = vadd.f32 0.0, %v1137
        %v1139 = vpop.f32.mrb[0].mxu0
        %v1140 = vpop.f32.mrb[0].mxu0
        %v1141 = vpop.f32.mrb[0].mxu0
        %1142 = vmatprep.mubr.bf16.mxu0 0
        %1143 = vmatmul.mubr.bf16.gmra.mrb[0].mxu0 %v1020
        %v1144 = vpop.f32.mrb[0].mxu0
        %v1145 = vadd.f32 0.0, %v1144
        %v1146 = vpop.f32.mrb[0].mxu0
        %v1147 = vpop.f32.mrb[0].mxu0
        %v1148 = vadd.f32 0.0, %v1147
        %v1149 = vpop.f32.mrb[0].mxu0
        %1150 = vmatprep.mubr.bf16.mxu0 0
        %1151 = vmatmul.mubr.bf16.gmra.mrb[0].mxu0 %v1021
        %v1152 = vpop.f32.mrb[0].mxu0
        %v1153 = vpop.f32.mrb[0].mxu0
        %v1154 = vpop.f32.mrb[0].mxu0
        %v1155 = vadd.f32 0.0, %v1154
        %v1156 = vpop.f32.mrb[0].mxu0
        %1157 = vmatprep.mubr.bf16.mxu0 0
        %1158 = vmatmul.mubr.bf16.gmra.mrb[0].mxu0 %v1022
        %v1159 = vpop.f32.mrb[0].mxu0
        %v1160 = vadd.f32 0.0, %v1159
        %v1161 = vpop.f32.mrb[0].mxu0
        %v1162 = vpop.f32.mrb[0].mxu0
        %v1163 = vpop.f32.mrb[0].mxu0
        %1164 = vdwg.mxu0
        %v1165 = vadd.f32 %v964, %v1123
        %v1166 = vadd.f32 %v967, %v1126
        %v1167 = vadd.f32 %v974, %v1133
        %v1168 = vadd.f32 %v979, %v1138
        %v1169 = vadd.f32 %v986, %v1145
        %v1170 = vadd.f32 %v989, %v1148
        %v1171 = vadd.f32 %v996, %v1155
        %v1172 = vadd.f32 %v1001, %v1160
        %v1173 = vld [vmem:[#allocation3 + $0x9] sm:$0xff]
        %v1174 = vld [vmem:[#allocation3 + $0x11] sm:$0xff]
        %v1175 = vld [vmem:[#allocation3 + $0x19] sm:$0xff]
        %v1176 = vld [vmem:[#allocation3 + $0x21] sm:$0xff]
        %v1177 = vld [vmem:[#allocation3 + $0x29] sm:$0xff]
        %v1178 = vld [vmem:[#allocation3 + $0x31] sm:$0xff]
        %v1179 = vld [vmem:[#allocation3 + $0x39] sm:$0xff]
        %v1180 = vld [vmem:[#allocation3 + $0x41] sm:$0xff]
        %v1181 = vld [vmem:[#allocation3 + $0x49] sm:$0xff]
        %v1182 = vld [vmem:[#allocation3 + $0x51] sm:$0xff]
        %v1183 = vld [vmem:[#allocation3 + $0x59] sm:$0xff]
        %v1184 = vpack.c.bf16 %v1174, %v1173
        %v1185 = vpack.c.bf16 %v1176, %v1175
        %v1186 = vpack.c.bf16 %v1178, %v1177
        %v1187 = vpack.c.bf16 %v1180, %v1179
        %v1188 = vpack.c.bf16 %v1182, %v1181
        %v1189 = vpack.c.bf16 %v1183, %v1183
        %s1190 = scalar_lea.vmem [#allocation9], 128
        %v1191 = vld [vmem:[%s1190] sm:$0xf]
        %v1192 = vld [vmem:[%s1190 + $0x4] sm:$0xf]
        %v1193 = vld [vmem:[%s1190 + $0x8] sm:$0xf]
        %v1194 = vld [vmem:[%s1190 + $0xc] sm:$0xf]
        %v1195 = vld [vmem:[%s1190 + $0x10] sm:$0xf]
        %v1196 = vld [vmem:[%s1190 + $0x14] sm:$0xf]
        %v1197 = vld [vmem:[%s1190 + $0x18] sm:$0xf]
        %v1198 = vld [vmem:[%s1190 + $0x1c] sm:$0xf]
        %v1199 = vld [vmem:[%s1190 + $0x20] sm:$0xf]
        %v1200 = vld [vmem:[%s1190 + $0x24] sm:$0xf]
        %v1201 = vld [vmem:[%s1190 + $0x28] sm:$0xf]
        %v1202 = vld [vmem:[%s1190 + $0x2c] sm:$0xf]
        %v1203 = vld [vmem:[%s1190 + $0x30] sm:$0xf]
        %v1204 = vld [vmem:[%s1190 + $0x34] sm:$0xf]
        %v1205 = vld [vmem:[%s1190 + $0x38] sm:$0xf]
        %v1206 = vld [vmem:[%s1190 + $0x3c] sm:$0xf]
        %v1223 = vunpack.c.l.b16 %v1191
        %v1224 = vunpack.c.l.b16 %v1192
        %v1225 = vunpack.c.l.b16 %v1193
        %v1226 = vunpack.c.l.b16 %v1194
        %v1227 = vunpack.c.l.b16 %v1195
        %v1228 = vunpack.c.l.b16 %v1196
        %v1229 = vunpack.c.l.b16 %v1197
        %v1230 = vunpack.c.l.b16 %v1198
        %v1231 = vunpack.c.l.b16 %v1199
        %v1232 = vunpack.c.l.b16 %v1200
        %v1233 = vunpack.c.l.b16 %v1201
        %v1234 = vunpack.c.l.b16 %v1202
        %v1235 = vunpack.c.l.b16 %v1203
        %v1236 = vunpack.c.l.b16 %v1204
        %v1237 = vunpack.c.l.b16 %v1205
        %v1238 = vunpack.c.l.b16 %v1206
        %v1239 = vpack.c.b16 %v1224, %v1223
        %v1240 = vpack.c.b16 %v1226, %v1225
        %v1241 = vpack.c.b16 %v1228, %v1227
        %v1242 = vpack.c.b16 %v1230, %v1229
        %v1243 = vpack.c.b16 %v1232, %v1231
        %v1244 = vpack.c.b16 %v1234, %v1233
        %v1245 = vpack.c.b16 %v1236, %v1235
        %v1246 = vpack.c.b16 %v1238, %v1237
        %1255 = vmatprep.subr.bf16.mxu0 0
        %1256 = vmatpush1.bf16.msra.mxu0 %v1239
        %1257 = vmatprep.subr.bf16.mxu0 0
        %1258 = vmatpush1.bf16.msra.mxu0 %v1240
        %1259 = vmatprep.subr.bf16.mxu0 0
        %1260 = vmatpush1.bf16.msra.mxu0 %v1241
        %1261 = vmatprep.subr.bf16.mxu0 0
        %1262 = vmatpush1.bf16.msra.mxu0 %v1242
        %1263 = vmatprep.subr.bf16.mxu0 0
        %1264 = vmatpush1.bf16.msra.mxu0 %v1243
        %1265 = vmatprep.subr.bf16.mxu0 0
        %1266 = vmatpush1.bf16.msra.mxu0 %v1244
        %1267 = vmatprep.subr.bf16.mxu0 0
        %1268 = vmatpush1.bf16.msra.mxu0 %v1245
        %1269 = vmatprep.subr.bf16.mxu0 0
        %1270 = vmatpush1.bf16.msra.mxu0 %v1246
        %1271 = vmatprep.subr.bf16.mxu0 0
        %1272 = vmatpush1.bf16.msra.mxu0 0
        %1273 = vmatprep.subr.bf16.mxu0 0
        %1274 = vmatpush1.bf16.msra.mxu0 0
        %1275 = vmatprep.subr.bf16.mxu0 0
        %1276 = vmatpush1.bf16.msra.mxu0 0
        %1277 = vmatprep.subr.bf16.mxu0 0
        %1278 = vmatpush1.bf16.msra.mxu0 0
        %1279 = vmatprep.subr.bf16.mxu0 0
        %1280 = vmatpush1.bf16.msra.mxu0 0
        %1281 = vmatprep.subr.bf16.mxu0 0
        %1282 = vmatpush1.bf16.msra.mxu0 0
        %1283 = vmatprep.subr.bf16.mxu0 0
        %1284 = vmatpush1.bf16.msra.mxu0 0
        %1285 = vmatprep.subr.bf16.mxu0 0
        %1286 = vmatpush1.bf16.msra.mxu0 0
        %1287 = vmatprep.mubr.bf16.mxu0 0
        %1288 = vmatmul.mubr.bf16.gmra.mrb[0].mxu0 %v1184
        %v1289 = vpop.f32.mrb[0].mxu0
        %v1290 = vadd.f32 0.0, %v1289
        %v1291 = vpop.f32.mrb[0].mxu0
        %v1292 = vpop.f32.mrb[0].mxu0
        %v1293 = vadd.f32 0.0, %v1292
        %v1294 = vpop.f32.mrb[0].mxu0
        %1295 = vmatprep.mubr.bf16.mxu0 0
        %1296 = vmatmul.mubr.bf16.gmra.mrb[0].mxu0 %v1185
        %v1297 = vpop.f32.mrb[0].mxu0
        %v1298 = vpop.f32.mrb[0].mxu0
        %v1299 = vpop.f32.mrb[0].mxu0
        %v1300 = vadd.f32 0.0, %v1299
        %v1301 = vpop.f32.mrb[0].mxu0
        %1302 = vmatprep.mubr.bf16.mxu0 0
        %1303 = vmatmul.mubr.bf16.gmra.mrb[0].mxu0 %v1186
        %v1304 = vpop.f32.mrb[0].mxu0
        %v1305 = vadd.f32 0.0, %v1304
        %v1306 = vpop.f32.mrb[0].mxu0
        %v1307 = vpop.f32.mrb[0].mxu0
        %v1308 = vpop.f32.mrb[0].mxu0
        %1309 = vmatprep.mubr.bf16.mxu0 0
        %1310 = vmatmul.mubr.bf16.gmra.mrb[0].mxu0 %v1187
        %v1311 = vpop.f32.mrb[0].mxu0
        %v1312 = vadd.f32 0.0, %v1311
        %v1313 = vpop.f32.mrb[0].mxu0
        %v1314 = vpop.f32.mrb[0].mxu0
        %v1315 = vadd.f32 0.0, %v1314
        %v1316 = vpop.f32.mrb[0].mxu0
        %1317 = vmatprep.mubr.bf16.mxu0 0
        %1318 = vmatmul.mubr.bf16.gmra.mrb[0].mxu0 %v1188
        %v1319 = vpop.f32.mrb[0].mxu0
        %v1320 = vpop.f32.mrb[0].mxu0
        %v1321 = vpop.f32.mrb[0].mxu0
        %v1322 = vadd.f32 0.0, %v1321
        %v1323 = vpop.f32.mrb[0].mxu0
        %1324 = vmatprep.mubr.bf16.mxu0 0
        %1325 = vmatmul.mubr.bf16.gmra.mrb[0].mxu0 %v1189
        %v1326 = vpop.f32.mrb[0].mxu0
        %v1327 = vadd.f32 0.0, %v1326
        %v1328 = vpop.f32.mrb[0].mxu0
        %v1329 = vpop.f32.mrb[0].mxu0
        %v1330 = vpop.f32.mrb[0].mxu0
        %1331 = vdwg.mxu0
        %v1332 = vadd.f32 %v1165, %v1290
        %v1333 = vadd.f32 %v1166, %v1293
        %v1334 = vadd.f32 %v1167, %v1300
        %v1335 = vadd.f32 %v1168, %v1305
        %v1336 = vadd.f32 %v1169, %v1312
        %v1337 = vadd.f32 %v1170, %v1315
        %v1338 = vadd.f32 %v1171, %v1322
        %v1339 = vadd.f32 %v1172, %v1327
        %v1340 = vld [vmem:[%s238] sm:$0xff]
        %v1341 = vld [vmem:[%s238 + $0x8] sm:$0xff]
        %v1342 = vadd.f32 %v1332, %v1340
        %v1343 = vadd.f32 %v1333, %v1341
        %v1344 = vmax.f32 %v1342, 0.0
        %v1345 = vmax.f32 %v1343, 0.0
        %1346 = vst [vmem:[%s272] sm:$0xff] %v1344
        %1347 = vst [vmem:[%s272 + $0x8] sm:$0xff] %v1345
        %v1348 = vld [vmem:[%s285] sm:$0xff]
        %v1349 = vld [vmem:[%s285 + $0x8] sm:$0xff]
        %v1350 = vadd.f32 %v1334, %v1348
        %v1351 = vadd.f32 %v1335, %v1349
        %v1352 = vmax.f32 %v1350, 0.0
        %v1353 = vmax.f32 %v1351, 0.0
        %s1354 = scalar_lea.vmem %s272, 16 [#allocation10]
        %1355 = vst [vmem:[%s1354] sm:$0xff] %v1352
        %1356 = vst [vmem:[%s1354 + $0x8] sm:$0xff] %v1353
        %v1357 = vld [vmem:[%s290] sm:$0xff]
        %v1358 = vld [vmem:[%s290 + $0x8] sm:$0xff]
        %v1359 = vadd.f32 %v1336, %v1357
        %v1360 = vadd.f32 %v1337, %v1358
        %v1361 = vmax.f32 %v1359, 0.0
        %v1362 = vmax.f32 %v1360, 0.0
        %s1363 = scalar_lea.vmem %s272, 32 [#allocation10]
        %1364 = vst [vmem:[%s1363] sm:$0xff] %v1361
        %1365 = vst [vmem:[%s1363 + $0x8] sm:$0xff] %v1362
        %v1366 = vld [vmem:[%s295] sm:$0xff]
        %v1367 = vld [vmem:[%s295 + $0x8] sm:$0xff]
        %v1368 = vadd.f32 %v1338, %v1366
        %v1369 = vadd.f32 %v1339, %v1367
        %v1370 = vmax.f32 %v1368, 0.0
        %v1371 = vmax.f32 %v1369, 0.0
        %s1372 = scalar_lea.vmem %s272, 48 [#allocation10]
        %1373 = vst [vmem:[%s1372] sm:$0xff] %v1370
        %1374 = vst [vmem:[%s1372 + $0x8] sm:$0xff] %v1371
        %s1375 = sand.u32 %s141, 1
        %s1376 = scalar_lea.sflag [#allocation6], %s1375
        %s1377 = sand.u32 %s141, 1
        %s1378 = smul.addr %s1377, 64
        %s1379 = scalar_lea.vmem [#allocation10], %s1378
        // Predicated region
        $region53: #{tpu_custom_call.1} parent=39 // pred_check
          %p1380 = pneg %p151
        $region54: #{tpu_custom_call.1} parent=39 // pred_check_branch
          %1382 = sbr.rel (%p1380) target = $region56
        $region55: #{tpu_custom_call.1} parent=39 // pred_region
          %s1383 = smul.u32 4, %s23
          %s1385 = ssub.s32 1024, 1024
          %1386 = vsyncadd %s1376, %s1385
          %s1387 = smul.addr %s1383, 2
          %s1388 = smul.addr %s1387, 128
          %s1389 = scalar_lea.hbm %s5, %s1388
          %s1390 = sshll.u32 %s1379, 4
          %s1391 = int_to_ptr.vmem [resolvable:$true] %s1390
          %1396 = dma.vmem_to_hbm [thread:$0]  %s1391, 1024, %s1389, %s1376, 128, 128, 8
        $region56: #{tpu_custom_call.1} parent=39 // pred_fallthru
          _
      $region40: #{tpu_custom_call.1} parent=5 // pred_fallthru
        _
      %p1397 = scmp.le.s32.totalorder 2, %s18
      // Predicated region
      $region57: #{tpu_custom_call.1} parent=5 // pred_check
        %p1398 = pneg %p1397
      $region58: #{tpu_custom_call.1} parent=5 // pred_check_branch
        %1400 = sbr.rel (%p1398) target = $region60
      $region59: #{tpu_custom_call.1} parent=5 // pred_region
        %s1401 = ssub.s32 %s18, 2
        // Predicated region
        $region61: #{tpu_custom_call.1} parent=59 // pred_check
          %p1402 = pneg %p157
        $region62: #{tpu_custom_call.1} parent=59 // pred_check_branch
          %1404 = sbr.rel (%p1402) target = $region64
        $region63: #{tpu_custom_call.1} parent=59 // pred_region
          %s1405 = sand.u32 %s142, 1
          %s1406 = scalar_lea.sflag [#allocation6], %s1405
          %s1407 = sand.u32 %s142, 1
          %s1408 = smul.addr %s1407, 64
          %s1409 = scalar_lea.vmem [#allocation10], %s1408
          %1410 = dma.done %s1406, 1024
        $region64: #{tpu_custom_call.1} parent=59 // pred_fallthru
          _
      $region60: #{tpu_custom_call.1} parent=5 // pred_fallthru
        _
    $region6: #{tpu_custom_call.1} parent=1 // loop_footer
      %s22 = sadd.s32 1, %s18
    $region7: #{tpu_custom_call.1} parent=1 // loop_footer_branch
      %17 = sbr.rel target = $region3
    $region8: #{tpu_custom_call.1} parent=1 // loop_exit
      _
    %1411 = vsyncpa [#allocation5], 1
    %s1412 = scalar_lea.sflag [#allocation5], 1
    %1413 = vsyncpa %s1412, 1
    %1414 = vsyncpa [#allocation8], 1
    %1415 = vsyncpa [#allocation6], 1
    %s1416 = scalar_lea.sflag [#allocation6], 1
    %1417 = vsyncpa %s1416, 1

</llo_original>
